<compile_context>
chip_gen: v5e
topology: v5e:2x2
jax: 0.10.0
libtpu: 0.0.40
codegen_flags: <defaults>
</compile_context>

<pallas_src>
import jax
import jax.numpy as jnp
from jax.experimental import pallas as pl
from jax.experimental.pallas import tpu as pltpu


# ----------------------------------------------------------------------------
# Fused Pallas kernel: one image per grid step.
# ----------------------------------------------------------------------------
def _dense_layer_kernel(x_ref, w1_ref, b1_ref, wb_ref, bb_ref, wc_ref, bc_ref,
                        o1_ref, o2_ref, padb_ref, padc_ref):
    # x_ref   : (H, W*Cin)            packed input rows
    # w1_ref  : (W*Cin, (W+2)*IC2)    merged 1x1 weights (branch1a ‖ branch2a), BN folded
    # b1_ref  : (1, (W+2)*IC2)        bias row (zero on padded border groups)
    # wb_ref  : (3, (W+2)*IC2, (W+2)*G2)  per-dy banded 3x3 weights (branch1b ‖ branch2b)
    # bb_ref  : (1, (W+2)*G2)
    # wc_ref  : (3, (W+2)*G2, W*G)    per-dy banded 3x3 weights (branch2c)
    # bc_ref  : (1, W*G)
    # o1_ref  : (H, (W+2)*G2)         merged b1b/b2b output (padded row layout)
    # o2_ref  : (H, W*G)              branch2c output
    # padb_ref, padc_ref : VMEM scratch, (H+2, (W+2)*C) padded intermediates (f32)
    f32 = jnp.float32
    H = x_ref.shape[0]
    wb_pad = padb_ref.shape[1]
    wc_pad = padc_ref.shape[1]
    mxu_dt = w1_ref.dtype

    def mm(a, b):
        return jnp.dot(a.astype(mxu_dt), b, preferred_element_type=f32)

    # ---- Stage 1: merged 1x1 convs (branch1a ‖ branch2a) + bias + ReLU ---------
    m1 = jnp.maximum(mm(x_ref[...], w1_ref[...]) + b1_ref[...], 0.0)   # (H, (W+2)*IC2)

    zrow_b = jnp.zeros((1, wb_pad), f32)
    padb_ref[0:1, :] = zrow_b                 # top zero-pad row
    padb_ref[H + 1:H + 2, :] = zrow_b         # bottom zero-pad row
    padb_ref[1:H + 1, :] = m1                 # interior (horizontal pad is already in m1)

    # ---- Stage 2: merged 3x3 convs (branch1b ‖ branch2b), one matmul per dy ----
    acc = jnp.zeros((H, wc_pad), f32)
    for dy in range(3):
        acc = acc + mm(padb_ref[dy:dy + H, :], wb_ref[dy])
    m2 = jnp.maximum(acc + bb_ref[...], 0.0)                           # (H, (W+2)*G2)
    o1_ref[...] = m2.astype(o1_ref.dtype)

    zrow_c = jnp.zeros((1, wc_pad), f32)
    padc_ref[0:1, :] = zrow_c
    padc_ref[H + 1:H + 2, :] = zrow_c
    padc_ref[1:H + 1, :] = m2

    # ---- Stage 3: branch2c 3x3 (weights zero out the branch1b half) ------------
    acc3 = jnp.zeros((H, o2_ref.shape[-1]), f32)
    for dy in range(3):
        acc3 = acc3 + mm(padc_ref[dy:dy + H, :], wc_ref[dy])
    o2_ref[...] = jnp.maximum(acc3 + bc_ref[...], 0.0).astype(o2_ref.dtype)


# ----------------------------------------------------------------------------
# Host-side packing: fold BN, merge branches, build banded block weights.
# ----------------------------------------------------------------------------
def _pack_params(params, W, compute_dtype):
    (w1a, s1a, b1a), _, _ = params['branch1a']
    (w1b, s1b, b1b), _, _ = params['branch1b']
    (w2a, s2a, b2a), _, _ = params['branch2a']
    (w2b, s2b, b2b), _, _ = params['branch2b']
    (w2c, s2c, b2c), _, _ = params['branch2c']

    cin = w1a.shape[2]
    inter = w1a.shape[3]
    growth = w1b.shape[3]
    IC2, G2, G = 2 * inter, 2 * growth, growth
    f32 = jnp.float32

    # Fold BN scale into the conv weights (conv is linear); keep only the bias add.
    f1a = (w1a * s1a).reshape(cin, inter)
    f2a = (w2a * s2a).reshape(cin, inter)
    f1b = w1b * s1b                    # (3,3,inter,growth)
    f2b = w2b * s2b
    f2c = w2c * s2c                    # (3,3,growth,growth)

    ar = jnp.arange(W)
    # pixel-group selection matrices (input pixel group -> output pixel group)
    s_1x1 = jnp.zeros((W, W + 2), f32).at[ar, ar + 1].set(1.0)              # unpadded -> padded
    s_pad = [jnp.zeros((W + 2, W + 2), f32).at[ar + dx, ar + 1].set(1.0)    # padded -> padded
             for dx in range(3)]
    s_val = [jnp.zeros((W + 2, W), f32).at[ar + dx, ar].set(1.0)            # padded -> unpadded
             for dx in range(3)]

    # Stage 1: branch1a ‖ branch2a merged 1x1; output in padded row layout.
    wm = jnp.concatenate([f1a, f2a], axis=1)                                # (cin, IC2)
    bd1 = jnp.kron(s_1x1, wm)                                               # (W*cin, (W+2)*IC2)

    # Stage 2: branch1b ‖ branch2b merged 3x3; per-dy banded weight contracts (dx, cin).
    def blk_b(dy, dx):
        blk = jnp.zeros((IC2, G2), f32)
        blk = blk.at[:inter, :growth].set(f1b[dy, dx])
        blk = blk.at[inter:, growth:].set(f2b[dy, dx])
        return blk

    bdb = jnp.stack([sum(jnp.kron(s_pad[dx], blk_b(dy, dx)) for dx in range(3))
                     for dy in range(3)])                                   # (3,(W+2)*IC2,(W+2)*G2)

    # Stage 3: branch2c 3x3 reading only the branch2b half of the stage-2 output.
    def blk_c(dy, dx):
        return jnp.zeros((G2, G), f32).at[growth:, :].set(f2c[dy, dx])

    bdc = jnp.stack([sum(jnp.kron(s_val[dx], blk_c(dy, dx)) for dx in range(3))
                     for dy in range(3)])                                   # (3,(W+2)*G2,W*G)

    # Bias rows (padded border pixel groups get exactly zero -> ReLU keeps them zero).
    zi = jnp.zeros((IC2,), f32)
    zg = jnp.zeros((G2,), f32)
    rowa = jnp.concatenate([zi, jnp.tile(jnp.concatenate([b1a, b2a]), W), zi])[None, :]
    rowb = jnp.concatenate([zg, jnp.tile(jnp.concatenate([b1b, b2b]), W), zg])[None, :]
    rowc = jnp.tile(b2c, W)[None, :]

    cd = compute_dtype
    return (bd1.astype(cd), rowa.astype(f32), bdb.astype(cd), rowb.astype(f32),
            bdc.astype(cd), rowc.astype(f32), inter, growth)


# ----------------------------------------------------------------------------
# _DenseLayer.forward (Pallas) — NCHW in, NCHW out, like PyTorch.
# ----------------------------------------------------------------------------
def dense_layer_forward(x_nchw, params, *, compute_dtype=jnp.float32):
    N, C, H, W = x_nchw.shape
    (bd1, rowa, bdb, rowb, bdc, rowc, inter, growth) = _pack_params(params, W, compute_dtype)
    IC2, G2, G = 2 * inter, 2 * growth, growth
    Wp = W + 2

    # One boundary transpose of x; the original x is concatenated back untouched.
    x_nhwc = jnp.transpose(x_nchw, (0, 2, 3, 1))
    xp = x_nhwc.reshape(N, H, W * C).astype(compute_dtype)     # packed rows, lane-dense

    out_dtype = x_nchw.dtype
    # NOTE: for N == 1 on v7x a spatial (H) split would be needed to feed both
    # TensorCores; N=2 here already gives one image per core.
    o1, o2 = pl.pallas_call(
        _dense_layer_kernel,
        out_shape=(
            jax.ShapeDtypeStruct((N, H, Wp * G2), out_dtype),
            jax.ShapeDtypeStruct((N, H, W * G), out_dtype),
        ),
        grid=(N,),
        in_specs=[
            pl.BlockSpec((None, H, W * C), lambda n: (n, 0, 0)),
            pl.BlockSpec((W * C, Wp * IC2), lambda n: (0, 0)),
            pl.BlockSpec((1, Wp * IC2), lambda n: (0, 0)),
            pl.BlockSpec((3, Wp * IC2, Wp * G2), lambda n: (0, 0, 0)),
            pl.BlockSpec((1, Wp * G2), lambda n: (0, 0)),
            pl.BlockSpec((3, Wp * G2, W * G), lambda n: (0, 0, 0)),
            pl.BlockSpec((1, W * G), lambda n: (0, 0)),
        ],
        out_specs=[
            pl.BlockSpec((None, H, Wp * G2), lambda n: (n, 0, 0)),
            pl.BlockSpec((None, H, W * G), lambda n: (n, 0, 0)),
        ],
        scratch_shapes=[
            pltpu.VMEM((H + 2, Wp * IC2), jnp.float32),   # padded merged 1x1 output
            pltpu.VMEM((H + 2, Wp * G2), jnp.float32),    # padded merged b1b/b2b output
        ],
        compiler_params=pltpu.CompilerParams(
            dimension_semantics=("parallel",),
            vmem_limit_bytes=32 * 1024 * 1024,
        ),
    )(xp, bd1, rowa, bdb, rowb, bdc, rowc)

    # Small XLA epilogue: un-pack, drop the horizontal padding, concat in NCHW.
    out1 = o1.reshape(N, H, Wp, G2)[:, :, 1:W + 1, :growth]     # branch1b output (NHWC)
    out2 = o2.reshape(N, H, W, G)                               # branch2c output (NHWC)
    out1_nchw = jnp.transpose(out1, (0, 3, 1, 2))
    out2_nchw = jnp.transpose(out2, (0, 3, 1, 2))
    return jnp.concatenate([x_nchw, out1_nchw, out2_nchw], axis=1)


# ----------------------------------------------------------------------------
# Parameter construction (deterministic, synthetic) — mirrors the PyTorch module.
# ----------------------------------------------------------------------------
def _make_basicconv_params(key, cin, cout, k):
    kw, kg, kb, km, kv = jax.random.split(key, 5)
    w_hwio = 0.1 * jax.random.normal(kw, (k, k, cin, cout), jnp.float32)
    gamma = jax.random.uniform(kg, (cout,), jnp.float32, 0.8, 1.2)
    beta = 0.05 * jax.random.normal(kb, (cout,), jnp.float32)
    running_mean = 0.05 * jax.random.normal(km, (cout,), jnp.float32)
    running_var = jax.random.uniform(kv, (cout,), jnp.float32, 0.5, 1.5)
    eps = 1e-5
    scale = gamma / jnp.sqrt(running_var + eps)       # fold BN (eval mode)
    bias = beta - running_mean * scale
    return w_hwio, scale, bias


def init_dense_layer_params(key, num_input_features, growth_rate, bottleneck_width):
    growth = growth_rate // 2
    inter = int(growth * bottleneck_width / 4) * 4
    if inter > num_input_features / 2:
        inter = int(num_input_features / 8) * 4
        print('adjust inter_channel to ', inter)
    keys = jax.random.split(key, 5)
    return {
        'branch1a': (_make_basicconv_params(keys[0], num_input_features, inter, 1), 1, 0),
        'branch1b': (_make_basicconv_params(keys[1], inter, growth, 3), 3, 1),
        'branch2a': (_make_basicconv_params(keys[2], num_input_features, inter, 1), 1, 0),
        'branch2b': (_make_basicconv_params(keys[3], inter, growth, 3), 3, 1),
        'branch2c': (_make_basicconv_params(keys[4], growth, growth, 3), 3, 1),
    }


# ----------------------------------------------------------------------------
# Pure-JAX reference (high-precision) for correctness check.
# ----------------------------------------------------------------------------
def _ref_conv_bn_relu(x_nhwc, w_hwio, scale, bias, padding):
    y = jax.lax.conv_general_dilated(
        x_nhwc, w_hwio, window_strides=(1, 1),
        padding=[(padding, padding), (padding, padding)],
        dimension_numbers=('NHWC', 'HWIO', 'NHWC'),
        precision=jax.lax.Precision.HIGHEST)
    return jnp.maximum(y * scale + bias, 0.0)


def dense_layer_forward_ref(x_nchw, params):
    x = jnp.transpose(x_nchw, (0, 2, 3, 1))

    def run(name, inp):
        (w, s, b), _k, p = params[name]
        return _ref_conv_bn_relu(inp, w, s, b, p)

    out1 = run('branch1b', run('branch1a', x))
    out2 = run('branch2c', run('branch2b', run('branch2a', x)))
    out = jnp.concatenate([x, out1, out2], axis=-1)
    return jnp.transpose(out, (0, 3, 1, 2))


if __name__ == "__main__":
    key = jax.random.PRNGKey(0)
    k_params, k_x = jax.random.split(key)

    # Module config: num_input_features=32, growth_rate=16, bottleneck_width=1
    #   -> growth=8, inter_channel=8, output channels = 32 + 8 + 8 = 48.
    N, C, H, W = 2, 32, 16, 16
    params = init_dense_layer_params(k_params, C, growth_rate=16, bottleneck_width=1)
    x = jax.random.normal(k_x, (N, C, H, W), jnp.float32)

    # f32 path (v5e-safe default): tight correctness bar.
    fwd = jax.jit(lambda xx: dense_layer_forward(xx, params))
    out = jax.block_until_ready(fwd(x))
    assert out.shape == (N, C + 8 + 8, H, W), out.shape

    ref = jax.block_until_ready(dense_layer_forward_ref(x, params))
    max_err = float(jnp.max(jnp.abs(out - ref)))
    assert jnp.allclose(out, ref, atol=1e-4, rtol=1e-4), max_err

    # bf16 MXU-operand path (v6e/v7x); f32 accumulation + f32 epilogue.
    fwd_bf16 = jax.jit(lambda xx: dense_layer_forward(xx, params,
                                                      compute_dtype=jnp.bfloat16))
    out_bf16 = jax.block_until_ready(fwd_bf16(x))
    assert jnp.allclose(out_bf16, ref, atol=1e-1, rtol=1e-1), \
        float(jnp.max(jnp.abs(out_bf16 - ref)))

    print("KERNEL_OK")
</pallas_src>

<mosaic_0001>
module attributes {stable_mosaic.version = 11 : i64} {
  func.func @_dense_layer_kernel(%arg0: i32, %arg1: memref<1x16x512xf32, #tpu.memory_space<vmem>>, %arg2: memref<512x288xf32, #tpu.memory_space<vmem>>, %arg3: memref<1x288xf32, #tpu.memory_space<vmem>>, %arg4: memref<3x288x288xf32, #tpu.memory_space<vmem>>, %arg5: memref<1x288xf32, #tpu.memory_space<vmem>>, %arg6: memref<3x288x128xf32, #tpu.memory_space<vmem>>, %arg7: memref<1x128xf32, #tpu.memory_space<vmem>>, %arg8: memref<1x16x288xf32, #tpu.memory_space<vmem>>, %arg9: memref<1x16x128xf32, #tpu.memory_space<vmem>>, %arg10: memref<18x288xf32, #tpu.memory_space<vmem>>, %arg11: memref<18x288xf32, #tpu.memory_space<vmem>>) attributes {dimension_semantics = [#tpu.dimension_semantics<parallel>], iteration_bounds = array<i64: 2>, scalar_prefetch = 0 : i64, scratch_operands = 2 : i64, tpu.core_type = #tpu.core_type<tc>, window_params = [{transform_indices = @transform_0, window_bounds = array<i64: 1, 16, 512>}, {pipeline_mode = #tpu.pipeline_mode<synchronous>, transform_indices = @transform_1, window_bounds = array<i64: 512, 288>}, {pipeline_mode = #tpu.pipeline_mode<synchronous>, transform_indices = @transform_2, window_bounds = array<i64: 1, 288>}, {pipeline_mode = #tpu.pipeline_mode<synchronous>, transform_indices = @transform_3, window_bounds = array<i64: 3, 288, 288>}, {pipeline_mode = #tpu.pipeline_mode<synchronous>, transform_indices = @transform_4, window_bounds = array<i64: 1, 288>}, {pipeline_mode = #tpu.pipeline_mode<synchronous>, transform_indices = @transform_5, window_bounds = array<i64: 3, 288, 128>}, {pipeline_mode = #tpu.pipeline_mode<synchronous>, transform_indices = @transform_6, window_bounds = array<i64: 1, 128>}, {transform_indices = @transform_7, window_bounds = array<i64: 1, 16, 288>}, {transform_indices = @transform_8, window_bounds = array<i64: 1, 16, 128>}]} {
    %c0 = arith.constant 0 : index
    %c0_0 = arith.constant 0 : index
    %c0_1 = arith.constant 0 : index
    %0 = vector.load %arg1[%c0, %c0_0, %c0_1] : memref<1x16x512xf32, #tpu.memory_space<vmem>>, vector<1x16x512xf32>
    %1 = vector.shape_cast %0 : vector<1x16x512xf32> to vector<16x512xf32>
    %c0_2 = arith.constant 0 : index
    %c0_3 = arith.constant 0 : index
    %2 = vector.load %arg2[%c0_2, %c0_3] : memref<512x288xf32, #tpu.memory_space<vmem>>, vector<512x288xf32>
    %cst = arith.constant dense<0.000000e+00> : vector<16x288xf32>
    %3 = tpu.matmul %1, %2, %cst {dimension_numbers = #tpu.dot_dimension_numbers<[1], [0], [0], [1], [0, 0, 1, 1], [], []>} : vector<16x512xf32>, vector<512x288xf32>, vector<16x288xf32> -> vector<16x288xf32>
    %c0_4 = arith.constant 0 : index
    %c0_5 = arith.constant 0 : index
    %4 = vector.load %arg3[%c0_4, %c0_5] : memref<1x288xf32, #tpu.memory_space<vmem>>, vector<1x288xf32>
    %5 = vector.broadcast %4 : vector<1x288xf32> to vector<16x288xf32>
    %6 = arith.addf %3, %5 : vector<16x288xf32>
    %cst_6 = arith.constant 0.000000e+00 : f32
    %7 = vector.broadcast %cst_6 : f32 to vector<16x288xf32>
    %8 = arith.maximumf %6, %7 : vector<16x288xf32>
    %cst_7 = arith.constant 0.000000e+00 : f32
    %9 = vector.broadcast %cst_7 : f32 to vector<1x288xf32>
    %c0_8 = arith.constant 0 : index
    %c0_9 = arith.constant 0 : index
    %10 = vector.load %arg10[%c0_8, %c0_9] : memref<18x288xf32, #tpu.memory_space<vmem>>, vector<1x288xf32>
    tpu.vector_store %arg10[%c0_8, %c0_9], %9 {strides = array<i32>} : memref<18x288xf32, #tpu.memory_space<vmem>>, vector<1x288xf32>,
    %c17 = arith.constant 17 : index
    %c0_10 = arith.constant 0 : index
    %11 = vector.load %arg10[%c17, %c0_10] : memref<18x288xf32, #tpu.memory_space<vmem>>, vector<1x288xf32>
    tpu.vector_store %arg10[%c17, %c0_10], %9 {strides = array<i32>} : memref<18x288xf32, #tpu.memory_space<vmem>>, vector<1x288xf32>,
    %c1 = arith.constant 1 : index
    %c0_11 = arith.constant 0 : index
    %12 = vector.load %arg10[%c1, %c0_11] : memref<18x288xf32, #tpu.memory_space<vmem>>, vector<16x288xf32>
    tpu.vector_store %arg10[%c1, %c0_11], %8 {strides = array<i32>} : memref<18x288xf32, #tpu.memory_space<vmem>>, vector<16x288xf32>,
    %cst_12 = arith.constant 0.000000e+00 : f32
    %13 = vector.broadcast %cst_12 : f32 to vector<16x288xf32>
    %c0_13 = arith.constant 0 : index
    %c0_14 = arith.constant 0 : index
    %14 = vector.load %arg10[%c0_13, %c0_14] : memref<18x288xf32, #tpu.memory_space<vmem>>, vector<16x288xf32>
    %c0_15 = arith.constant 0 : index
    %c0_16 = arith.constant 0 : index
    %c0_17 = arith.constant 0 : index
    %15 = vector.load %arg4[%c0_15, %c0_16, %c0_17] : memref<3x288x288xf32, #tpu.memory_space<vmem>>, vector<1x288x288xf32>
    %16 = vector.shape_cast %15 : vector<1x288x288xf32> to vector<288x288xf32>
    %cst_18 = arith.constant dense<0.000000e+00> : vector<16x288xf32>
    %17 = tpu.matmul %14, %16, %cst_18 {dimension_numbers = #tpu.dot_dimension_numbers<[1], [0], [0], [1], [0, 0, 1, 1], [], []>} : vector<16x288xf32>, vector<288x288xf32>, vector<16x288xf32> -> vector<16x288xf32>
    %18 = arith.addf %13, %17 : vector<16x288xf32>
    %c1_19 = arith.constant 1 : index
    %c0_20 = arith.constant 0 : index
    %19 = vector.load %arg10[%c1_19, %c0_20] : memref<18x288xf32, #tpu.memory_space<vmem>>, vector<16x288xf32>
    %c1_21 = arith.constant 1 : index
    %c0_22 = arith.constant 0 : index
    %c0_23 = arith.constant 0 : index
    %20 = vector.load %arg4[%c1_21, %c0_22, %c0_23] : memref<3x288x288xf32, #tpu.memory_space<vmem>>, vector<1x288x288xf32>
    %21 = vector.shape_cast %20 : vector<1x288x288xf32> to vector<288x288xf32>
    %cst_24 = arith.constant dense<0.000000e+00> : vector<16x288xf32>
    %22 = tpu.matmul %19, %21, %cst_24 {dimension_numbers = #tpu.dot_dimension_numbers<[1], [0], [0], [1], [0, 0, 1, 1], [], []>} : vector<16x288xf32>, vector<288x288xf32>, vector<16x288xf32> -> vector<16x288xf32>
    %23 = arith.addf %18, %22 : vector<16x288xf32>
    %c2 = arith.constant 2 : index
    %c0_25 = arith.constant 0 : index
    %24 = vector.load %arg10[%c2, %c0_25] : memref<18x288xf32, #tpu.memory_space<vmem>>, vector<16x288xf32>
    %c2_26 = arith.constant 2 : index
    %c0_27 = arith.constant 0 : index
    %c0_28 = arith.constant 0 : index
    %25 = vector.load %arg4[%c2_26, %c0_27, %c0_28] : memref<3x288x288xf32, #tpu.memory_space<vmem>>, vector<1x288x288xf32>
    %26 = vector.shape_cast %25 : vector<1x288x288xf32> to vector<288x288xf32>
    %cst_29 = arith.constant dense<0.000000e+00> : vector<16x288xf32>
    %27 = tpu.matmul %24, %26, %cst_29 {dimension_numbers = #tpu.dot_dimension_numbers<[1], [0], [0], [1], [0, 0, 1, 1], [], []>} : vector<16x288xf32>, vector<288x288xf32>, vector<16x288xf32> -> vector<16x288xf32>
    %28 = arith.addf %23, %27 : vector<16x288xf32>
    %c0_30 = arith.constant 0 : index
    %c0_31 = arith.constant 0 : index
    %29 = vector.load %arg5[%c0_30, %c0_31] : memref<1x288xf32, #tpu.memory_space<vmem>>, vector<1x288xf32>
    %30 = vector.broadcast %29 : vector<1x288xf32> to vector<16x288xf32>
    %31 = arith.addf %28, %30 : vector<16x288xf32>
    %cst_32 = arith.constant 0.000000e+00 : f32
    %32 = vector.broadcast %cst_32 : f32 to vector<16x288xf32>
    %33 = arith.maximumf %31, %32 : vector<16x288xf32>
    %c0_33 = arith.constant 0 : index
    %c0_34 = arith.constant 0 : index
    %c0_35 = arith.constant 0 : index
    %34 = vector.load %arg8[%c0_33, %c0_34, %c0_35] : memref<1x16x288xf32, #tpu.memory_space<vmem>>, vector<1x16x288xf32>
    %35 = vector.shape_cast %34 : vector<1x16x288xf32> to vector<16x288xf32>
    %36 = vector.shape_cast %33 : vector<16x288xf32> to vector<1x16x288xf32>
    tpu.vector_store %arg8[%c0_33, %c0_34, %c0_35], %36 {strides = array<i32>} : memref<1x16x288xf32, #tpu.memory_space<vmem>>, vector<1x16x288xf32>,
    %cst_36 = arith.constant 0.000000e+00 : f32
    %37 = vector.broadcast %cst_36 : f32 to vector<1x288xf32>
    %c0_37 = arith.constant 0 : index
    %c0_38 = arith.constant 0 : index
    %38 = vector.load %arg11[%c0_37, %c0_38] : memref<18x288xf32, #tpu.memory_space<vmem>>, vector<1x288xf32>
    tpu.vector_store %arg11[%c0_37, %c0_38], %37 {strides = array<i32>} : memref<18x288xf32, #tpu.memory_space<vmem>>, vector<1x288xf32>,
    %c17_39 = arith.constant 17 : index
    %c0_40 = arith.constant 0 : index
    %39 = vector.load %arg11[%c17_39, %c0_40] : memref<18x288xf32, #tpu.memory_space<vmem>>, vector<1x288xf32>
    tpu.vector_store %arg11[%c17_39, %c0_40], %37 {strides = array<i32>} : memref<18x288xf32, #tpu.memory_space<vmem>>, vector<1x288xf32>,
    %c1_41 = arith.constant 1 : index
    %c0_42 = arith.constant 0 : index
    %40 = vector.load %arg11[%c1_41, %c0_42] : memref<18x288xf32, #tpu.memory_space<vmem>>, vector<16x288xf32>
    tpu.vector_store %arg11[%c1_41, %c0_42], %33 {strides = array<i32>} : memref<18x288xf32, #tpu.memory_space<vmem>>, vector<16x288xf32>,
    %cst_43 = arith.constant 0.000000e+00 : f32
    %41 = vector.broadcast %cst_43 : f32 to vector<16x128xf32>
    %c0_44 = arith.constant 0 : index
    %c0_45 = arith.constant 0 : index
    %42 = vector.load %arg11[%c0_44, %c0_45] : memref<18x288xf32, #tpu.memory_space<vmem>>, vector<16x288xf32>
    %c0_46 = arith.constant 0 : index
    %c0_47 = arith.constant 0 : index
    %c0_48 = arith.constant 0 : index
    %43 = vector.load %arg6[%c0_46, %c0_47, %c0_48] : memref<3x288x128xf32, #tpu.memory_space<vmem>>, vector<1x288x128xf32>
    %44 = vector.shape_cast %43 : vector<1x288x128xf32> to vector<288x128xf32>
    %cst_49 = arith.constant dense<0.000000e+00> : vector<16x128xf32>
    %45 = tpu.matmul %42, %44, %cst_49 {dimension_numbers = #tpu.dot_dimension_numbers<[1], [0], [0], [1], [0, 0, 1, 1], [], []>} : vector<16x288xf32>, vector<288x128xf32>, vector<16x128xf32> -> vector<16x128xf32>
    %46 = arith.addf %41, %45 : vector<16x128xf32>
    %c1_50 = arith.constant 1 : index
    %c0_51 = arith.constant 0 : index
    %47 = vector.load %arg11[%c1_50, %c0_51] : memref<18x288xf32, #tpu.memory_space<vmem>>, vector<16x288xf32>
    %c1_52 = arith.constant 1 : index
    %c0_53 = arith.constant 0 : index
    %c0_54 = arith.constant 0 : index
    %48 = vector.load %arg6[%c1_52, %c0_53, %c0_54] : memref<3x288x128xf32, #tpu.memory_space<vmem>>, vector<1x288x128xf32>
    %49 = vector.shape_cast %48 : vector<1x288x128xf32> to vector<288x128xf32>
    %cst_55 = arith.constant dense<0.000000e+00> : vector<16x128xf32>
    %50 = tpu.matmul %47, %49, %cst_55 {dimension_numbers = #tpu.dot_dimension_numbers<[1], [0], [0], [1], [0, 0, 1, 1], [], []>} : vector<16x288xf32>, vector<288x128xf32>, vector<16x128xf32> -> vector<16x128xf32>
    %51 = arith.addf %46, %50 : vector<16x128xf32>
    %c2_56 = arith.constant 2 : index
    %c0_57 = arith.constant 0 : index
    %52 = vector.load %arg11[%c2_56, %c0_57] : memref<18x288xf32, #tpu.memory_space<vmem>>, vector<16x288xf32>
    %c2_58 = arith.constant 2 : index
    %c0_59 = arith.constant 0 : index
    %c0_60 = arith.constant 0 : index
    %53 = vector.load %arg6[%c2_58, %c0_59, %c0_60] : memref<3x288x128xf32, #tpu.memory_space<vmem>>, vector<1x288x128xf32>
    %54 = vector.shape_cast %53 : vector<1x288x128xf32> to vector<288x128xf32>
    %cst_61 = arith.constant dense<0.000000e+00> : vector<16x128xf32>
    %55 = tpu.matmul %52, %54, %cst_61 {dimension_numbers = #tpu.dot_dimension_numbers<[1], [0], [0], [1], [0, 0, 1, 1], [], []>} : vector<16x288xf32>, vector<288x128xf32>, vector<16x128xf32> -> vector<16x128xf32>
    %56 = arith.addf %51, %55 : vector<16x128xf32>
    %c0_62 = arith.constant 0 : index
    %c0_63 = arith.constant 0 : index
    %57 = vector.load %arg7[%c0_62, %c0_63] : memref<1x128xf32, #tpu.memory_space<vmem>>, vector<1x128xf32>
    %58 = vector.broadcast %57 : vector<1x128xf32> to vector<16x128xf32>
    %59 = arith.addf %56, %58 : vector<16x128xf32>
    %cst_64 = arith.constant 0.000000e+00 : f32
    %60 = vector.broadcast %cst_64 : f32 to vector<16x128xf32>
    %61 = arith.maximumf %59, %60 : vector<16x128xf32>
    %c0_65 = arith.constant 0 : index
    %c0_66 = arith.constant 0 : index
    %c0_67 = arith.constant 0 : index
    %62 = vector.load %arg9[%c0_65, %c0_66, %c0_67] : memref<1x16x128xf32, #tpu.memory_space<vmem>>, vector<1x16x128xf32>
    %63 = vector.shape_cast %62 : vector<1x16x128xf32> to vector<16x128xf32>
    %64 = vector.shape_cast %61 : vector<16x128xf32> to vector<1x16x128xf32>
    tpu.vector_store %arg9[%c0_65, %c0_66, %c0_67], %64 {strides = array<i32>} : memref<1x16x128xf32, #tpu.memory_space<vmem>>, vector<1x16x128xf32>,
    return
  }
  func.func @transform_0(%arg0: i32) -> (i32, i32, i32) {
    %c0_i32 = arith.constant 0 : i32
    %c0_i32_0 = arith.constant 0 : i32
    %c0_i32_1 = arith.constant 0 : i32
    return %arg0, %c0_i32, %c0_i32_0 : i32, i32, i32
  }
  func.func @transform_1(%arg0: i32) -> (i32, i32) {
    %c0_i32 = arith.constant 0 : i32
    %c0_i32_0 = arith.constant 0 : i32
    %c0_i32_1 = arith.constant 0 : i32
    return %c0_i32, %c0_i32_0 : i32, i32
  }
  func.func @transform_2(%arg0: i32) -> (i32, i32) {
    %c0_i32 = arith.constant 0 : i32
    %c0_i32_0 = arith.constant 0 : i32
    %c0_i32_1 = arith.constant 0 : i32
    return %c0_i32, %c0_i32_0 : i32, i32
  }
  func.func @transform_3(%arg0: i32) -> (i32, i32, i32) {
    %c0_i32 = arith.constant 0 : i32
    %c0_i32_0 = arith.constant 0 : i32
    %c0_i32_1 = arith.constant 0 : i32
    %c0_i32_2 = arith.constant 0 : i32
    return %c0_i32, %c0_i32_0, %c0_i32_1 : i32, i32, i32
  }
  func.func @transform_4(%arg0: i32) -> (i32, i32) {
    %c0_i32 = arith.constant 0 : i32
    %c0_i32_0 = arith.constant 0 : i32
    %c0_i32_1 = arith.constant 0 : i32
    return %c0_i32, %c0_i32_0 : i32, i32
  }
  func.func @transform_5(%arg0: i32) -> (i32, i32, i32) {
    %c0_i32 = arith.constant 0 : i32
    %c0_i32_0 = arith.constant 0 : i32
    %c0_i32_1 = arith.constant 0 : i32
    %c0_i32_2 = arith.constant 0 : i32
    return %c0_i32, %c0_i32_0, %c0_i32_1 : i32, i32, i32
  }
  func.func @transform_6(%arg0: i32) -> (i32, i32) {
    %c0_i32 = arith.constant 0 : i32
    %c0_i32_0 = arith.constant 0 : i32
    %c0_i32_1 = arith.constant 0 : i32
    return %c0_i32, %c0_i32_0 : i32, i32
  }
  func.func @transform_7(%arg0: i32) -> (i32, i32, i32) {
    %c0_i32 = arith.constant 0 : i32
    %c0_i32_0 = arith.constant 0 : i32
    %c0_i32_1 = arith.constant 0 : i32
    return %arg0, %c0_i32, %c0_i32_0 : i32, i32, i32
  }
  func.func @transform_8(%arg0: i32) -> (i32, i32, i32) {
    %c0_i32 = arith.constant 0 : i32
    %c0_i32_0 = arith.constant 0 : i32
    %c0_i32_1 = arith.constant 0 : i32
    return %arg0, %c0_i32, %c0_i32_0 : i32, i32, i32
  }
}

</mosaic_0001>

<llo_original>
// kernel: tile.14
$region0: #{tile.14}
  #allocation0 [shape = 's32[1]{0}', space=sflag, size = 0x4, scoped, tag = 'scoped memory for tile.14']
  %s0 = inlined_call_operand.vmem [shape: f32[16], index: 0, kind: input, shape index: {}]
  %s1 = inlined_call_operand.vmem [shape: f32[16,16], index: 1, kind: output, shape index: {}]
  // Predicated region
  $region2: #{tile.14} parent=0 // pred_check
    _
  $region3: #{tile.14} parent=0 // pred_check_branch
    %3 = sbr.rel (0) target = $region5
  $region4: #{tile.14} parent=0 // pred_region
    _
  $region5: #{tile.14} parent=0 // pred_fallthru
    _
  %v4 = vld [vmem:[%s0] ss:$0 sm:$0xff]
  %5 = vst [vmem:[%s1] sm:$0xff] %v4
  %s6 = scalar_lea.vmem %s1, 8
  %7 = vst [vmem:[%s6] sm:$0xff] %v4

// kernel: tile.15
$region0: #{tile.15}
  %s0 = inlined_call_operand.vmem [shape: f32[16,16], index: 0, kind: input, shape index: {}]
  %s1 = inlined_call_operand.vmem [shape: f32[256], index: 1, kind: output, shape index: {}]
  $region1: #{tile.15} parent=0
    #allocation0 [shape = 'u8[4096]{0}', space=vmem, size = 0x1000, scoped, tag = 'scoped mem for output reshape']
    %s2 = smov 3
    %v3 = vld [vmem:[%s0] ss:$8 sm:%s2]
    %vm4 = vcmask 130048
    %5 = vst.msk [vmem:[#allocation0] sm:$0x3] %vm4, %v3
    %s6 = scalar_lea.vmem %s0, 7
    %s7 = smov 3
    %v8 = vld [vmem:[%s6] ss:$8 sm:%s7]
    %9 = vrot.lane.b32.xlu0 %v8, 112
    %v10 = vpop.permute.xlu0 %9
    %vm11 = vcmask 1048448
    %12 = vst.msk [vmem:[#allocation0] sm:$0x3] %vm11, %v10
    %s13 = scalar_lea.vmem %s0, 6
    %s14 = smov 3
    %v15 = vld [vmem:[%s13] ss:$8 sm:%s14]
    %16 = vrot.lane.b32.xlu0 %v15, 96
    %v17 = vpop.permute.xlu0 %16
    %vm18 = vcmask 917248
    %19 = vst.msk [vmem:[#allocation0] sm:$0x3] %vm18, %v17
    %s20 = scalar_lea.vmem %s0, 5
    %s21 = smov 3
    %v22 = vld [vmem:[%s20] ss:$8 sm:%s21]
    %23 = vrot.lane.b32.xlu0 %v22, 80
    %v24 = vpop.permute.xlu0 %23
    %vm25 = vcmask 786048
    %26 = vst.msk [vmem:[#allocation0] sm:$0x3] %vm25, %v24
    %s27 = scalar_lea.vmem %s0, 4
    %s28 = smov 3
    %v29 = vld [vmem:[%s27] ss:$8 sm:%s28]
    %30 = vrot.lane.b32.xlu0 %v29, 64
    %v31 = vpop.permute.xlu0 %30
    %vm32 = vcmask 654848
    %33 = vst.msk [vmem:[#allocation0] sm:$0x3] %vm32, %v31
    %s34 = scalar_lea.vmem %s0, 3
    %s35 = smov 3
    %v36 = vld [vmem:[%s34] ss:$8 sm:%s35]
    %37 = vrot.lane.b32.xlu0 %v36, 48
    %v38 = vpop.permute.xlu0 %37
    %vm39 = vcmask 523648
    %40 = vst.msk [vmem:[#allocation0] sm:$0x3] %vm39, %v38
    %s41 = scalar_lea.vmem %s0, 2
    %s42 = smov 3
    %v43 = vld [vmem:[%s41] ss:$8 sm:%s42]
    %44 = vrot.lane.b32.xlu0 %v43, 32
    %v45 = vpop.permute.xlu0 %44
    %vm46 = vcmask 392448
    %47 = vst.msk [vmem:[#allocation0] sm:$0x3] %vm46, %v45
    %s48 = scalar_lea.vmem %s0, 1
    %s49 = smov 3
    %v50 = vld [vmem:[%s48] ss:$8 sm:%s49]
    %51 = vrot.lane.b32.xlu0 %v50, 16
    %v52 = vpop.permute.xlu0 %51
    %vm53 = vcmask 261248
    %54 = vst.msk [vmem:[#allocation0] sm:$0x3] %vm53, %v52
    %s56 = ssub.s32 4, 1
    %v57 = vld [vmem:[#allocation0] sm:%s56]
    %s59 = ssub.s32 4, 1
    %60 = vst [vmem:[%s1] sm:%s59] %v57

// kernel: tile.22
$region0: #{tile.22}
  #allocation0 [shape = 's32[1]{0}', space=sflag, size = 0x4, scoped, tag = 'scoped memory for tile.22']
  %s0 = inlined_call_operand.vmem [shape: f32[8], index: 0, kind: input, shape index: {}]
  %s1 = inlined_call_operand.vmem [shape: f32[16,8], index: 1, kind: output, shape index: {}]
  // Predicated region
  $region2: #{tile.22} parent=0 // pred_check
    _
  $region3: #{tile.22} parent=0 // pred_check_branch
    %3 = sbr.rel (0) target = $region5
  $region4: #{tile.22} parent=0 // pred_region
    _
  $region5: #{tile.22} parent=0 // pred_fallthru
    _
  %v4 = vld [vmem:[%s0] ss:$0 sm:$0xff]
  %5 = vst [vmem:[%s1] sm:$0xff] %v4
  %s6 = scalar_lea.vmem %s1, 8
  %7 = vst [vmem:[%s6] sm:$0xff] %v4

// kernel: tile.23
$region0: #{tile.23}
  %s0 = inlined_call_operand.vmem [shape: f32[16,8], index: 0, kind: input, shape index: {}]
  %s1 = inlined_call_operand.vmem [shape: f32[1,128], index: 1, kind: output, shape index: {}]
  $region1: #{tile.23} parent=0
    #allocation0 [shape = 'u8[4096]{0}', space=vmem, size = 0x1000, scoped, tag = 'scoped mem for output reshape']
    %v2 = vld [vmem:[%s0] sm:$0x1]
    %vm3 = vcmask 64512
    %4 = vst.msk [vmem:[#allocation0] sm:$0x1] %vm3, %v2
    %s5 = scalar_lea.vmem %s0, 15
    %v6 = vld [vmem:[%s5] sm:$0x1]
    %7 = vrot.lane.b32.xlu0 %v6, 120
    %v8 = vpop.permute.xlu0 %7
    %vm9 = vcmask 1048512
    %10 = vst.msk [vmem:[#allocation0] sm:$0x1] %vm9, %v8
    %s11 = scalar_lea.vmem %s0, 14
    %v12 = vld [vmem:[%s11] sm:$0x1]
    %13 = vrot.lane.b32.xlu0 %v12, 112
    %v14 = vpop.permute.xlu0 %13
    %vm15 = vcmask 982912
    %16 = vst.msk [vmem:[#allocation0] sm:$0x1] %vm15, %v14
    %s17 = scalar_lea.vmem %s0, 13
    %v18 = vld [vmem:[%s17] sm:$0x1]
    %19 = vrot.lane.b32.xlu0 %v18, 104
    %v20 = vpop.permute.xlu0 %19
    %vm21 = vcmask 917312
    %22 = vst.msk [vmem:[#allocation0] sm:$0x1] %vm21, %v20
    %s23 = scalar_lea.vmem %s0, 12
    %v24 = vld [vmem:[%s23] sm:$0x1]
    %25 = vrot.lane.b32.xlu0 %v24, 96
    %v26 = vpop.permute.xlu0 %25
    %vm27 = vcmask 851712
    %28 = vst.msk [vmem:[#allocation0] sm:$0x1] %vm27, %v26
    %s29 = scalar_lea.vmem %s0, 11
    %v30 = vld [vmem:[%s29] sm:$0x1]
    %31 = vrot.lane.b32.xlu0 %v30, 88
    %v32 = vpop.permute.xlu0 %31
    %vm33 = vcmask 786112
    %34 = vst.msk [vmem:[#allocation0] sm:$0x1] %vm33, %v32
    %s35 = scalar_lea.vmem %s0, 10
    %v36 = vld [vmem:[%s35] sm:$0x1]
    %37 = vrot.lane.b32.xlu0 %v36, 80
    %v38 = vpop.permute.xlu0 %37
    %vm39 = vcmask 720512
    %40 = vst.msk [vmem:[#allocation0] sm:$0x1] %vm39, %v38
    %s41 = scalar_lea.vmem %s0, 9
    %v42 = vld [vmem:[%s41] sm:$0x1]
    %43 = vrot.lane.b32.xlu0 %v42, 72
    %v44 = vpop.permute.xlu0 %43
    %vm45 = vcmask 654912
    %46 = vst.msk [vmem:[#allocation0] sm:$0x1] %vm45, %v44
    %s47 = scalar_lea.vmem %s0, 8
    %v48 = vld [vmem:[%s47] sm:$0x1]
    %49 = vrot.lane.b32.xlu0 %v48, 64
    %v50 = vpop.permute.xlu0 %49
    %vm51 = vcmask 589312
    %52 = vst.msk [vmem:[#allocation0] sm:$0x1] %vm51, %v50
    %s53 = scalar_lea.vmem %s0, 7
    %v54 = vld [vmem:[%s53] sm:$0x1]
    %55 = vrot.lane.b32.xlu0 %v54, 56
    %v56 = vpop.permute.xlu0 %55
    %vm57 = vcmask 523712
    %58 = vst.msk [vmem:[#allocation0] sm:$0x1] %vm57, %v56
    %s59 = scalar_lea.vmem %s0, 6
    %v60 = vld [vmem:[%s59] sm:$0x1]
    %61 = vrot.lane.b32.xlu0 %v60, 48
    %v62 = vpop.permute.xlu0 %61
    %vm63 = vcmask 458112
    %64 = vst.msk [vmem:[#allocation0] sm:$0x1] %vm63, %v62
    %s65 = scalar_lea.vmem %s0, 5
    %v66 = vld [vmem:[%s65] sm:$0x1]
    %67 = vrot.lane.b32.xlu0 %v66, 40
    %v68 = vpop.permute.xlu0 %67
    %vm69 = vcmask 392512
    %70 = vst.msk [vmem:[#allocation0] sm:$0x1] %vm69, %v68
    %s71 = scalar_lea.vmem %s0, 4
    %v72 = vld [vmem:[%s71] sm:$0x1]
    %73 = vrot.lane.b32.xlu0 %v72, 32
    %v74 = vpop.permute.xlu0 %73
    %vm75 = vcmask 326912
    %76 = vst.msk [vmem:[#allocation0] sm:$0x1] %vm75, %v74
    %s77 = scalar_lea.vmem %s0, 3
    %v78 = vld [vmem:[%s77] sm:$0x1]
    %79 = vrot.lane.b32.xlu0 %v78, 24
    %v80 = vpop.permute.xlu0 %79
    %vm81 = vcmask 261312
    %82 = vst.msk [vmem:[#allocation0] sm:$0x1] %vm81, %v80
    %s83 = scalar_lea.vmem %s0, 2
    %v84 = vld [vmem:[%s83] sm:$0x1]
    %85 = vrot.lane.b32.xlu0 %v84, 16
    %v86 = vpop.permute.xlu0 %85
    %vm87 = vcmask 195712
    %88 = vst.msk [vmem:[#allocation0] sm:$0x1] %vm87, %v86
    %s89 = scalar_lea.vmem %s0, 1
    %v90 = vld [vmem:[%s89] sm:$0x1]
    %91 = vrot.lane.b32.xlu0 %v90, 8
    %v92 = vpop.permute.xlu0 %91
    %vm93 = vcmask 130112
    %94 = vst.msk [vmem:[#allocation0] sm:$0x1] %vm93, %v92
    %s96 = ssub.s32 2, 1
    %v97 = vld [vmem:[#allocation0] sm:%s96]
    %s99 = ssub.s32 2, 1
    %100 = vst [vmem:[%s1] sm:%s99] %v97

// kernel: _lambda_.1
$region0: #{_lambda_.1}
  #allocation0 [shape = 'u32[]', space=smem, size = 0x4, offset = 0x4, fixed_abs, tag = 'smem constant byte address 0x4 - core index']
  #allocation1 [shape = 'u32[72,128]{1,0:T(1,128)}', space=vmem, size = 0x9000, scoped, tag = 'internal scratch']
  #allocation2 [shape = 'f32[18,288]{1,0:T(8,128)}', space=vmem, size = 0x9000, scoped, tag = 'scratch operand']
  #allocation3 [shape = 'f32[18,288]{1,0:T(8,128)}', space=vmem, size = 0x9000, scoped, tag = 'scratch operand']
  %s0 = inlined_call_operand.vmem [shape: f32[2,16,512], index: 0, kind: input, shape index: {}]
  %s1 = inlined_call_operand.vmem [shape: f32[512,288], index: 1, kind: input, shape index: {}]
  %s2 = inlined_call_operand.vmem [shape: f32[1,288], index: 2, kind: input, shape index: {}]
  %s3 = inlined_call_operand.vmem [shape: f32[3,288,288], index: 3, kind: input, shape index: {}]
  %s4 = inlined_call_operand.vmem [shape: f32[1,288], index: 4, kind: input, shape index: {}]
  %s5 = inlined_call_operand.vmem [shape: f32[3,288,128], index: 5, kind: input, shape index: {}]
  %s6 = inlined_call_operand.vmem [shape: f32[1,128], index: 6, kind: input, shape index: {}]
  %s7 = inlined_call_operand.vmem [shape: f32[2,16,288], index: 7, kind: output, shape index: {0}]
  %s8 = inlined_call_operand.vmem [shape: f32[2,16,128], index: 8, kind: output, shape index: {1}]
  %9 = xla_tuple %s7, %s8
  %s10 = sld [smem:[#allocation0]]
  $region69: #{_lambda_.1} parent=0
    _
  %s12 = ssub.s32 1, %s10
  %s13 = scalar_select 0, %s12, %s10
  loop: start=0, step=1, limit=4
  $region2: #{_lambda_.1} parent=0 // loop_pre_header
    _
  $region3: #{_lambda_.1} parent=0 // loop_header
    %s15 = sphi 0, %s19
    %p16 = scmp.ge.s32.totalorder %s15, 4
    %s25 = sphi 0, %s27
    %s28 = sphi 0, %s25
    %s29 = sphi 0, %s28
    %s45 = sphi 0, %s29
    %s49 = sphi 0, %s49
    %s51 = sphi 0, %s49
    %s52 = sphi 0, %s51
    %s66 = sphi 0, %s52
    %s70 = sphi 0, %s70
    %s72 = sphi 0, %s70
    %s73 = sphi 0, %s72
    %s87 = sphi 0, %s73
    %s91 = sphi 0, %s91
    %s93 = sphi 0, %s91
    %s94 = sphi 0, %s93
    %s108 = sphi 0, %s94
    %s112 = sphi 0, %s112
    %s114 = sphi 0, %s112
    %s115 = sphi 0, %s114
    %s129 = sphi 0, %s115
    %s133 = sphi 0, %s133
    %s135 = sphi 0, %s133
    %s136 = sphi 0, %s135
    %s150 = sphi 0, %s136
    %s154 = sphi 0, %s154
    %s156 = sphi 0, %s154
    %s157 = sphi 0, %s156
    %s171 = sphi 0, %s157
    %s177 = sphi 0, %s179
    %s180 = sphi 0, %s177
    %s181 = sphi 0, %s180
    %s197 = sphi 0, %s181
    %s203 = sphi 0, %s205
    %s206 = sphi 0, %s203
    %s207 = sphi 0, %s206
    %s223 = sphi 0, %s207
  $region4: #{_lambda_.1} parent=0 // loop_header_branch
    %18 = sbr.rel (%p16) target = $region8
  $region5: #{_lambda_.1} parent=0 // loop_body
    %s20 = ssub.s32 %s15, 1
    %s21 = ssub.s32 %s15, 2
    %s22 = sadd.s32 %s15, 1
    %s23 = ssub.s32 %s15, %s22
    %p24 = scmp.eq.s32.totalorder %s23, 0
    %s26 = sadd.s32 %s25, 1
    %s27 = scalar_select %p24, %s25, %s26
    %p30 = pneg %p24
    %p31 = scmp.eq.s32.totalorder %s15, 1
    %p32 = por %p30, %p31
    %p33 = scmp.ne.s32.totalorder %s25, %s28
    %p34 = scmp.eq.s32.totalorder %s15, 0
    %p35 = por %p33, %p34
    %p36 = scmp.ne.s32.totalorder %s25, %s28
    %p37 = scmp.eq.s32.totalorder %s20, 1
    %p38 = por %p36, %p37
    %p39 = scmp.ne.s32.totalorder %s28, %s29
    %p40 = scmp.eq.s32.totalorder %s20, 0
    %p41 = por %p39, %p40
    %p42 = scmp.ne.s32.totalorder %s28, %s29
    %p43 = scmp.eq.s32.totalorder %s21, 1
    %p44 = por %p42, %p43
    %p46 = scmp.ne.s32.totalorder %s29, %s45
    %p47 = scmp.eq.s32.totalorder %s21, 0
    %p48 = por %p46, %p47
    %s50 = sadd.s32 %s49, 1
    %p53 = scmp.eq.s32.totalorder %s15, 1
    %p54 = scmp.ne.s32.totalorder %s49, %s51
    %p55 = scmp.eq.s32.totalorder %s15, 0
    %p56 = por %p54, %p55
    %p57 = scmp.ne.s32.totalorder %s49, %s51
    %p58 = scmp.eq.s32.totalorder %s20, 1
    %p59 = por %p57, %p58
    %p60 = scmp.ne.s32.totalorder %s51, %s52
    %p61 = scmp.eq.s32.totalorder %s20, 0
    %p62 = por %p60, %p61
    %p63 = scmp.ne.s32.totalorder %s51, %s52
    %p64 = scmp.eq.s32.totalorder %s21, 1
    %p65 = por %p63, %p64
    %p67 = scmp.ne.s32.totalorder %s52, %s66
    %p68 = scmp.eq.s32.totalorder %s21, 0
    %p69 = por %p67, %p68
    %s71 = sadd.s32 %s70, 1
    %p74 = scmp.eq.s32.totalorder %s15, 1
    %p75 = scmp.ne.s32.totalorder %s70, %s72
    %p76 = scmp.eq.s32.totalorder %s15, 0
    %p77 = por %p75, %p76
    %p78 = scmp.ne.s32.totalorder %s70, %s72
    %p79 = scmp.eq.s32.totalorder %s20, 1
    %p80 = por %p78, %p79
    %p81 = scmp.ne.s32.totalorder %s72, %s73
    %p82 = scmp.eq.s32.totalorder %s20, 0
    %p83 = por %p81, %p82
    %p84 = scmp.ne.s32.totalorder %s72, %s73
    %p85 = scmp.eq.s32.totalorder %s21, 1
    %p86 = por %p84, %p85
    %p88 = scmp.ne.s32.totalorder %s73, %s87
    %p89 = scmp.eq.s32.totalorder %s21, 0
    %p90 = por %p88, %p89
    %s92 = sadd.s32 %s91, 1
    %p95 = scmp.eq.s32.totalorder %s15, 1
    %p96 = scmp.ne.s32.totalorder %s91, %s93
    %p97 = scmp.eq.s32.totalorder %s15, 0
    %p98 = por %p96, %p97
    %p99 = scmp.ne.s32.totalorder %s91, %s93
    %p100 = scmp.eq.s32.totalorder %s20, 1
    %p101 = por %p99, %p100
    %p102 = scmp.ne.s32.totalorder %s93, %s94
    %p103 = scmp.eq.s32.totalorder %s20, 0
    %p104 = por %p102, %p103
    %p105 = scmp.ne.s32.totalorder %s93, %s94
    %p106 = scmp.eq.s32.totalorder %s21, 1
    %p107 = por %p105, %p106
    %p109 = scmp.ne.s32.totalorder %s94, %s108
    %p110 = scmp.eq.s32.totalorder %s21, 0
    %p111 = por %p109, %p110
    %s113 = sadd.s32 %s112, 1
    %p116 = scmp.eq.s32.totalorder %s15, 1
    %p117 = scmp.ne.s32.totalorder %s112, %s114
    %p118 = scmp.eq.s32.totalorder %s15, 0
    %p119 = por %p117, %p118
    %p120 = scmp.ne.s32.totalorder %s112, %s114
    %p121 = scmp.eq.s32.totalorder %s20, 1
    %p122 = por %p120, %p121
    %p123 = scmp.ne.s32.totalorder %s114, %s115
    %p124 = scmp.eq.s32.totalorder %s20, 0
    %p125 = por %p123, %p124
    %p126 = scmp.ne.s32.totalorder %s114, %s115
    %p127 = scmp.eq.s32.totalorder %s21, 1
    %p128 = por %p126, %p127
    %p130 = scmp.ne.s32.totalorder %s115, %s129
    %p131 = scmp.eq.s32.totalorder %s21, 0
    %p132 = por %p130, %p131
    %s134 = sadd.s32 %s133, 1
    %p137 = scmp.eq.s32.totalorder %s15, 1
    %p138 = scmp.ne.s32.totalorder %s133, %s135
    %p139 = scmp.eq.s32.totalorder %s15, 0
    %p140 = por %p138, %p139
    %p141 = scmp.ne.s32.totalorder %s133, %s135
    %p142 = scmp.eq.s32.totalorder %s20, 1
    %p143 = por %p141, %p142
    %p144 = scmp.ne.s32.totalorder %s135, %s136
    %p145 = scmp.eq.s32.totalorder %s20, 0
    %p146 = por %p144, %p145
    %p147 = scmp.ne.s32.totalorder %s135, %s136
    %p148 = scmp.eq.s32.totalorder %s21, 1
    %p149 = por %p147, %p148
    %p151 = scmp.ne.s32.totalorder %s136, %s150
    %p152 = scmp.eq.s32.totalorder %s21, 0
    %p153 = por %p151, %p152
    %s155 = sadd.s32 %s154, 1
    %p158 = scmp.eq.s32.totalorder %s15, 1
    %p159 = scmp.ne.s32.totalorder %s154, %s156
    %p160 = scmp.eq.s32.totalorder %s15, 0
    %p161 = por %p159, %p160
    %p162 = scmp.ne.s32.totalorder %s154, %s156
    %p163 = scmp.eq.s32.totalorder %s20, 1
    %p164 = por %p162, %p163
    %p165 = scmp.ne.s32.totalorder %s156, %s157
    %p166 = scmp.eq.s32.totalorder %s20, 0
    %p167 = por %p165, %p166
    %p168 = scmp.ne.s32.totalorder %s156, %s157
    %p169 = scmp.eq.s32.totalorder %s21, 1
    %p170 = por %p168, %p169
    %p172 = scmp.ne.s32.totalorder %s157, %s171
    %p173 = scmp.eq.s32.totalorder %s21, 0
    %p174 = por %p172, %p173
    %s175 = ssub.s32 %s15, %s22
    %p176 = scmp.eq.s32.totalorder %s175, 0
    %s178 = sadd.s32 %s177, 1
    %s179 = scalar_select %p176, %s177, %s178
    %p182 = pneg %p176
    %p183 = scmp.eq.s32.totalorder %s15, 1
    %p184 = por %p182, %p183
    %p185 = scmp.ne.s32.totalorder %s177, %s180
    %p186 = scmp.eq.s32.totalorder %s15, 0
    %p187 = por %p185, %p186
    %p188 = scmp.ne.s32.totalorder %s177, %s180
    %p189 = scmp.eq.s32.totalorder %s20, 1
    %p190 = por %p188, %p189
    %p191 = scmp.ne.s32.totalorder %s180, %s181
    %p192 = scmp.eq.s32.totalorder %s20, 0
    %p193 = por %p191, %p192
    %p194 = scmp.ne.s32.totalorder %s180, %s181
    %p195 = scmp.eq.s32.totalorder %s21, 1
    %p196 = por %p194, %p195
    %p198 = scmp.ne.s32.totalorder %s181, %s197
    %p199 = scmp.eq.s32.totalorder %s21, 0
    %p200 = por %p198, %p199
    %s201 = ssub.s32 %s15, %s22
    %p202 = scmp.eq.s32.totalorder %s201, 0
    %s204 = sadd.s32 %s203, 1
    %s205 = scalar_select %p202, %s203, %s204
    %p208 = pneg %p202
    %p209 = scmp.eq.s32.totalorder %s15, 1
    %p210 = por %p208, %p209
    %p211 = scmp.ne.s32.totalorder %s203, %s206
    %p212 = scmp.eq.s32.totalorder %s15, 0
    %p213 = por %p211, %p212
    %p214 = scmp.ne.s32.totalorder %s203, %s206
    %p215 = scmp.eq.s32.totalorder %s20, 1
    %p216 = por %p214, %p215
    %p217 = scmp.ne.s32.totalorder %s206, %s207
    %p218 = scmp.eq.s32.totalorder %s20, 0
    %p219 = por %p217, %p218
    %p220 = scmp.ne.s32.totalorder %s206, %s207
    %p221 = scmp.eq.s32.totalorder %s21, 1
    %p222 = por %p220, %p221
    %p224 = scmp.ne.s32.totalorder %s207, %s223
    %p225 = scmp.eq.s32.totalorder %s21, 0
    %p226 = por %p224, %p225
    %p227 = scmp.le.s32.totalorder 1, %s15
    %p228 = scmp.lt.s32.totalorder %s15, 3
    %p229 = pnand %p227, %p228
    %p230 = pneg %p229
    // Predicated region
    $region9: #{_lambda_.1} parent=5 // pred_check
      _
    $region10: #{_lambda_.1} parent=5 // pred_check_branch
      %232 = sbr.rel (%p229) target = $region12
    $region11: #{_lambda_.1} parent=5 // pred_region
      %s233 = ssub.s32 %s15, 1
      // Predicated region
      $region13: #{_lambda_.1} parent=11 // pred_check
        %p234 = pneg %p62
      $region14: #{_lambda_.1} parent=11 // pred_check_branch
        %236 = sbr.rel (%p234) target = $region16
      $region15: #{_lambda_.1} parent=11 // pred_region
        _
      $region16: #{_lambda_.1} parent=11 // pred_fallthru
        _
      // Predicated region
      $region17: #{_lambda_.1} parent=11 // pred_check
        %p237 = pneg %p83
      $region18: #{_lambda_.1} parent=11 // pred_check_branch
        %239 = sbr.rel (%p237) target = $region20
      $region19: #{_lambda_.1} parent=11 // pred_region
        _
      $region20: #{_lambda_.1} parent=11 // pred_fallthru
        _
      // Predicated region
      $region21: #{_lambda_.1} parent=11 // pred_check
        %p240 = pneg %p104
      $region22: #{_lambda_.1} parent=11 // pred_check_branch
        %242 = sbr.rel (%p240) target = $region24
      $region23: #{_lambda_.1} parent=11 // pred_region
        _
      $region24: #{_lambda_.1} parent=11 // pred_fallthru
        _
      // Predicated region
      $region25: #{_lambda_.1} parent=11 // pred_check
        %p243 = pneg %p125
      $region26: #{_lambda_.1} parent=11 // pred_check_branch
        %245 = sbr.rel (%p243) target = $region28
      $region27: #{_lambda_.1} parent=11 // pred_region
        _
      $region28: #{_lambda_.1} parent=11 // pred_fallthru
        _
      // Predicated region
      $region29: #{_lambda_.1} parent=11 // pred_check
        %p246 = pneg %p146
      $region30: #{_lambda_.1} parent=11 // pred_check_branch
        %248 = sbr.rel (%p246) target = $region32
      $region31: #{_lambda_.1} parent=11 // pred_region
        _
      $region32: #{_lambda_.1} parent=11 // pred_fallthru
        _
      // Predicated region
      $region33: #{_lambda_.1} parent=11 // pred_check
        %p249 = pneg %p167
      $region34: #{_lambda_.1} parent=11 // pred_check_branch
        %251 = sbr.rel (%p249) target = $region36
      $region35: #{_lambda_.1} parent=11 // pred_region
        _
      $region36: #{_lambda_.1} parent=11 // pred_fallthru
        _
    $region12: #{_lambda_.1} parent=5 // pred_fallthru
      _
    %p252 = scmp.lt.s32.totalorder %s15, 2
    // Predicated region
    $region37: #{_lambda_.1} parent=5 // pred_check
      %p253 = pneg %p252
    $region38: #{_lambda_.1} parent=5 // pred_check_branch
      %255 = sbr.rel (%p253) target = $region40
    $region39: #{_lambda_.1} parent=5 // pred_region
      // Predicated region
      $region41: #{_lambda_.1} parent=39 // pred_check
        %p256 = pneg %p35
      $region42: #{_lambda_.1} parent=39 // pred_check_branch
        %258 = sbr.rel (%p256) target = $region44
      $region43: #{_lambda_.1} parent=39 // pred_region
        %p259 = scmp.lt.s32.totalorder %s15, 1
        %s260 = scalar_select %p259, %s15, 1
        %s261 = smul.addr %s260, 8
        %s262 = smul.addr %s261, 8
        %s263 = scalar_lea.vmem %s0, %s262
      $region44: #{_lambda_.1} parent=39 // pred_fallthru
        _
    $region40: #{_lambda_.1} parent=5 // pred_fallthru
      _
    %p264 = scmp.le.s32.totalorder 1, %s15
    %p265 = scmp.lt.s32.totalorder %s15, 3
    %p266 = pnand %p264, %p265
    %p267 = pneg %p266
    // Predicated region
    $region45: #{_lambda_.1} parent=5 // pred_check
      _
    $region46: #{_lambda_.1} parent=5 // pred_check_branch
      %269 = sbr.rel (%p266) target = $region48
    $region47: #{_lambda_.1} parent=5 // pred_region
      %s270 = ssub.s32 %s15, 1
      %p271 = scmp.lt.s32.totalorder %s20, 1
      %s272 = scalar_select %p271, %s20, 1
      %s273 = smul.addr %s272, 8
      %s274 = smul.addr %s273, 8
      %s275 = scalar_lea.vmem %s0, %s274
      %p276 = pneg %p41
      %p277 = pneg %p38
      %p278 = pneg %p62
      %p279 = pneg %p59
      %p280 = pneg %p83
      %p281 = pneg %p80
      %p282 = pneg %p104
      %p283 = pneg %p101
      %p284 = pneg %p125
      %p285 = pneg %p122
      %p286 = pneg %p146
      %p287 = pneg %p143
      %p288 = pneg %p167
      %p289 = pneg %p164
      %p290 = pneg %p193
      %p291 = pneg %p190
      %p292 = scmp.lt.s32.totalorder %s20, 1
      %s293 = scalar_select %p292, %s20, 1
      %s294 = smul.addr %s293, 6
      %s295 = smul.addr %s294, 8
      %s296 = scalar_lea.vmem %s7, %s295
      %p297 = pneg %p219
      %p298 = pneg %p216
      %p299 = scmp.lt.s32.totalorder %s20, 1
      %s300 = scalar_select %p299, %s20, 1
      %s301 = smul.addr %s300, 2
      %s302 = smul.addr %s301, 8
      %s303 = scalar_lea.vmem %s8, %s302
      %p304 = scmp.lt.s32.totalorder %s20, 1
      %s305 = scalar_select %p304, %s20, 1
      %s306 = smul.addr %s305, 8
      %s307 = smul.addr %s306, 8
      %s308 = scalar_lea.vmem %s0, %s307
      %p309 = scmp.lt.s32.totalorder %s20, 1
      %s310 = scalar_select %p309, %s20, 1
      %s311 = smul.addr %s310, 6
      %s312 = smul.addr %s311, 8
      %s313 = scalar_lea.vmem %s7, %s312
      %p314 = scmp.lt.s32.totalorder %s20, 1
      %s315 = scalar_select %p314, %s20, 1
      %s316 = smul.addr %s315, 2
      %s317 = smul.addr %s316, 8
      %s318 = scalar_lea.vmem %s8, %s317
      %v319 = vld [vmem:[%s308] sm:$0xff]
      %v320 = vld [vmem:[%s308 + $0x8] sm:$0xff]
      %v321 = vld [vmem:[%s308 + $0x10] sm:$0xff]
      %v322 = vld [vmem:[%s308 + $0x18] sm:$0xff]
      %v323 = vld [vmem:[%s308 + $0x20] sm:$0xff]
      %v324 = vld [vmem:[%s308 + $0x28] sm:$0xff]
      %v325 = vld [vmem:[%s308 + $0x30] sm:$0xff]
      %v326 = vld [vmem:[%s308 + $0x38] sm:$0xff]
      %v327 = vld [vmem:[%s1] sm:$0xff]
      %v328 = vld [vmem:[%s1 + $0x8] sm:$0xff]
      %v329 = vld [vmem:[%s1 + $0x10] sm:$0xff]
      %v330 = vld [vmem:[%s1 + $0x18] sm:$0xff]
      %v331 = vld [vmem:[%s1 + $0x20] sm:$0xff]
      %v332 = vld [vmem:[%s1 + $0x28] sm:$0xff]
      %v333 = vld [vmem:[%s1 + $0x30] sm:$0xff]
      %v334 = vld [vmem:[%s1 + $0x38] sm:$0xff]
      %v335 = vld [vmem:[%s1 + $0x40] sm:$0xff]
      %v336 = vld [vmem:[%s1 + $0x48] sm:$0xff]
      %v337 = vld [vmem:[%s1 + $0x50] sm:$0xff]
      %v338 = vld [vmem:[%s1 + $0x58] sm:$0xff]
      %v339 = vld [vmem:[%s1 + $0x60] sm:$0xff]
      %v340 = vld [vmem:[%s1 + $0x68] sm:$0xff]
      %v341 = vld [vmem:[%s1 + $0x70] sm:$0xff]
      %v342 = vld [vmem:[%s1 + $0x78] sm:$0xff]
      %v343 = vld [vmem:[%s1 + $0x80] sm:$0xff]
      %v344 = vld [vmem:[%s1 + $0x88] sm:$0xff]
      %v345 = vld [vmem:[%s1 + $0x90] sm:$0xff]
      %v346 = vld [vmem:[%s1 + $0x98] sm:$0xff]
      %v347 = vld [vmem:[%s1 + $0xa0] sm:$0xff]
      %v348 = vld [vmem:[%s1 + $0xa8] sm:$0xff]
      %v349 = vld [vmem:[%s1 + $0xb0] sm:$0xff]
      %v350 = vld [vmem:[%s1 + $0xb8] sm:$0xff]
      %v351 = vld [vmem:[%s1 + $0xc0] sm:$0xff]
      %v352 = vld [vmem:[%s1 + $0xc8] sm:$0xff]
      %v353 = vld [vmem:[%s1 + $0xd0] sm:$0xff]
      %v354 = vld [vmem:[%s1 + $0xd8] sm:$0xff]
      %v355 = vld [vmem:[%s1 + $0xe0] sm:$0xff]
      %v356 = vld [vmem:[%s1 + $0xe8] sm:$0xff]
      %v357 = vld [vmem:[%s1 + $0xf0] sm:$0xff]
      %v358 = vld [vmem:[%s1 + $0xf8] sm:$0xff]
      %v359 = vld [vmem:[%s1 + $0x100] sm:$0xff]
      %v360 = vld [vmem:[%s1 + $0x108] sm:$0xff]
      %v361 = vld [vmem:[%s1 + $0x110] sm:$0xff]
      %v362 = vld [vmem:[%s1 + $0x118] sm:$0xff]
      %v363 = vld [vmem:[%s1 + $0x120] sm:$0xff]
      %v364 = vld [vmem:[%s1 + $0x128] sm:$0xff]
      %v365 = vld [vmem:[%s1 + $0x130] sm:$0xff]
      %v366 = vld [vmem:[%s1 + $0x138] sm:$0xff]
      %v367 = vld [vmem:[%s1 + $0x140] sm:$0xff]
      %v368 = vld [vmem:[%s1 + $0x148] sm:$0xff]
      %v369 = vld [vmem:[%s1 + $0x150] sm:$0xff]
      %v370 = vld [vmem:[%s1 + $0x158] sm:$0xff]
      %v371 = vld [vmem:[%s1 + $0x160] sm:$0xff]
      %v372 = vld [vmem:[%s1 + $0x168] sm:$0xff]
      %v373 = vld [vmem:[%s1 + $0x170] sm:$0xff]
      %v374 = vld [vmem:[%s1 + $0x178] sm:$0xff]
      %v375 = vld [vmem:[%s1 + $0x180] sm:$0xff]
      %v376 = vld [vmem:[%s1 + $0x188] sm:$0xff]
      %v377 = vld [vmem:[%s1 + $0x190] sm:$0xff]
      %v378 = vld [vmem:[%s1 + $0x198] sm:$0xff]
      %v379 = vld [vmem:[%s1 + $0x1a0] sm:$0xff]
      %v380 = vld [vmem:[%s1 + $0x1a8] sm:$0xff]
      %v381 = vld [vmem:[%s1 + $0x1b0] sm:$0xff]
      %v382 = vld [vmem:[%s1 + $0x1b8] sm:$0xff]
      %v383 = vld [vmem:[%s1 + $0x1c0] sm:$0xff]
      %v384 = vld [vmem:[%s1 + $0x1c8] sm:$0xff]
      %v385 = vld [vmem:[%s1 + $0x1d0] sm:$0xff]
      %v386 = vld [vmem:[%s1 + $0x1d8] sm:$0xff]
      %v387 = vld [vmem:[%s1 + $0x1e0] sm:$0xff]
      %v388 = vld [vmem:[%s1 + $0x1e8] sm:$0xff]
      %v389 = vld [vmem:[%s1 + $0x1f0] sm:$0xff]
      %v390 = vld [vmem:[%s1 + $0x1f8] sm:$0xff]
      %v391 = vld [vmem:[%s1 + $0x200] sm:$0xff]
      %v392 = vld [vmem:[%s1 + $0x208] sm:$0xff]
      %v393 = vld [vmem:[%s1 + $0x210] sm:$0xff]
      %v394 = vld [vmem:[%s1 + $0x218] sm:$0xff]
      %v395 = vld [vmem:[%s1 + $0x220] sm:$0xff]
      %v396 = vld [vmem:[%s1 + $0x228] sm:$0xff]
      %v397 = vld [vmem:[%s1 + $0x230] sm:$0xff]
      %v398 = vld [vmem:[%s1 + $0x238] sm:$0xff]
      %v399 = vld [vmem:[%s1 + $0x240] sm:$0xff]
      %v400 = vld [vmem:[%s1 + $0x248] sm:$0xff]
      %v401 = vld [vmem:[%s1 + $0x250] sm:$0xff]
      %v402 = vld [vmem:[%s1 + $0x258] sm:$0xff]
      %v403 = vld [vmem:[%s1 + $0x260] sm:$0xff]
      %v404 = vld [vmem:[%s1 + $0x268] sm:$0xff]
      %v405 = vld [vmem:[%s1 + $0x270] sm:$0xff]
      %v406 = vld [vmem:[%s1 + $0x278] sm:$0xff]
      %v407 = vld [vmem:[%s1 + $0x280] sm:$0xff]
      %v408 = vld [vmem:[%s1 + $0x288] sm:$0xff]
      %v409 = vld [vmem:[%s1 + $0x290] sm:$0xff]
      %v410 = vld [vmem:[%s1 + $0x298] sm:$0xff]
      %v411 = vld [vmem:[%s1 + $0x2a0] sm:$0xff]
      %v412 = vld [vmem:[%s1 + $0x2a8] sm:$0xff]
      %v413 = vld [vmem:[%s1 + $0x2b0] sm:$0xff]
      %v414 = vld [vmem:[%s1 + $0x2b8] sm:$0xff]
      %v415 = vld [vmem:[%s1 + $0x2c0] sm:$0xff]
      %v416 = vld [vmem:[%s1 + $0x2c8] sm:$0xff]
      %v417 = vld [vmem:[%s1 + $0x2d0] sm:$0xff]
      %v418 = vld [vmem:[%s1 + $0x2d8] sm:$0xff]
      %v419 = vld [vmem:[%s1 + $0x2e0] sm:$0xff]
      %v420 = vld [vmem:[%s1 + $0x2e8] sm:$0xff]
      %v421 = vld [vmem:[%s1 + $0x2f0] sm:$0xff]
      %v422 = vld [vmem:[%s1 + $0x2f8] sm:$0xff]
      %v423 = vld [vmem:[%s1 + $0x300] sm:$0xff]
      %v424 = vld [vmem:[%s1 + $0x308] sm:$0xff]
      %v425 = vld [vmem:[%s1 + $0x310] sm:$0xff]
      %v426 = vld [vmem:[%s1 + $0x318] sm:$0xff]
      %v427 = vld [vmem:[%s1 + $0x320] sm:$0xff]
      %v428 = vld [vmem:[%s1 + $0x328] sm:$0xff]
      %v429 = vld [vmem:[%s1 + $0x330] sm:$0xff]
      %v430 = vld [vmem:[%s1 + $0x338] sm:$0xff]
      %v431 = vld [vmem:[%s1 + $0x340] sm:$0xff]
      %v432 = vld [vmem:[%s1 + $0x348] sm:$0xff]
      %v433 = vld [vmem:[%s1 + $0x350] sm:$0xff]
      %v434 = vld [vmem:[%s1 + $0x358] sm:$0xff]
      %v435 = vld [vmem:[%s1 + $0x360] sm:$0xff]
      %v436 = vld [vmem:[%s1 + $0x368] sm:$0xff]
      %v437 = vld [vmem:[%s1 + $0x370] sm:$0xff]
      %v438 = vld [vmem:[%s1 + $0x378] sm:$0xff]
      %v439 = vld [vmem:[%s1 + $0x380] sm:$0xff]
      %v440 = vld [vmem:[%s1 + $0x388] sm:$0xff]
      %v441 = vld [vmem:[%s1 + $0x390] sm:$0xff]
      %v442 = vld [vmem:[%s1 + $0x398] sm:$0xff]
      %v443 = vld [vmem:[%s1 + $0x3a0] sm:$0xff]
      %v444 = vld [vmem:[%s1 + $0x3a8] sm:$0xff]
      %v445 = vld [vmem:[%s1 + $0x3b0] sm:$0xff]
      %v446 = vld [vmem:[%s1 + $0x3b8] sm:$0xff]
      %v447 = vld [vmem:[%s1 + $0x3c0] sm:$0xff]
      %v448 = vld [vmem:[%s1 + $0x3c8] sm:$0xff]
      %v449 = vld [vmem:[%s1 + $0x3d0] sm:$0xff]
      %v450 = vld [vmem:[%s1 + $0x3d8] sm:$0xff]
      %v451 = vld [vmem:[%s1 + $0x3e0] sm:$0xff]
      %v452 = vld [vmem:[%s1 + $0x3e8] sm:$0xff]
      %v453 = vld [vmem:[%s1 + $0x3f0] sm:$0xff]
      %v454 = vld [vmem:[%s1 + $0x3f8] sm:$0xff]
      %v455 = vld [vmem:[%s1 + $0x400] sm:$0xff]
      %v456 = vld [vmem:[%s1 + $0x408] sm:$0xff]
      %v457 = vld [vmem:[%s1 + $0x410] sm:$0xff]
      %v458 = vld [vmem:[%s1 + $0x418] sm:$0xff]
      %v459 = vld [vmem:[%s1 + $0x420] sm:$0xff]
      %v460 = vld [vmem:[%s1 + $0x428] sm:$0xff]
      %v461 = vld [vmem:[%s1 + $0x430] sm:$0xff]
      %v462 = vld [vmem:[%s1 + $0x438] sm:$0xff]
      %v463 = vld [vmem:[%s1 + $0x440] sm:$0xff]
      %v464 = vld [vmem:[%s1 + $0x448] sm:$0xff]
      %v465 = vld [vmem:[%s1 + $0x450] sm:$0xff]
      %v466 = vld [vmem:[%s1 + $0x458] sm:$0xff]
      %v467 = vld [vmem:[%s1 + $0x460] sm:$0xff]
      %v468 = vld [vmem:[%s1 + $0x468] sm:$0xff]
      %v469 = vld [vmem:[%s1 + $0x470] sm:$0xff]
      %v470 = vld [vmem:[%s1 + $0x478] sm:$0xff]
      %v471 = vld [vmem:[%s1 + $0x480] sm:$0xff]
      %v472 = vld [vmem:[%s1 + $0x488] sm:$0xff]
      %v473 = vld [vmem:[%s1 + $0x490] sm:$0xff]
      %v474 = vld [vmem:[%s1 + $0x498] sm:$0xff]
      %v475 = vld [vmem:[%s1 + $0x4a0] sm:$0xff]
      %v476 = vld [vmem:[%s1 + $0x4a8] sm:$0xff]
      %v477 = vld [vmem:[%s1 + $0x4b0] sm:$0xff]
      %v478 = vld [vmem:[%s1 + $0x4b8] sm:$0xff]
      %v479 = vld [vmem:[%s1 + $0x4c0] sm:$0xff]
      %v480 = vld [vmem:[%s1 + $0x4c8] sm:$0xff]
      %v481 = vld [vmem:[%s1 + $0x4d0] sm:$0xff]
      %v482 = vld [vmem:[%s1 + $0x4d8] sm:$0xff]
      %v483 = vld [vmem:[%s1 + $0x4e0] sm:$0xff]
      %v484 = vld [vmem:[%s1 + $0x4e8] sm:$0xff]
      %v485 = vld [vmem:[%s1 + $0x4f0] sm:$0xff]
      %v486 = vld [vmem:[%s1 + $0x4f8] sm:$0xff]
      %v487 = vld [vmem:[%s1 + $0x500] sm:$0xff]
      %v488 = vld [vmem:[%s1 + $0x508] sm:$0xff]
      %v489 = vld [vmem:[%s1 + $0x510] sm:$0xff]
      %v490 = vld [vmem:[%s1 + $0x518] sm:$0xff]
      %v491 = vld [vmem:[%s1 + $0x520] sm:$0xff]
      %v492 = vld [vmem:[%s1 + $0x528] sm:$0xff]
      %v493 = vld [vmem:[%s1 + $0x530] sm:$0xff]
      %v494 = vld [vmem:[%s1 + $0x538] sm:$0xff]
      %v495 = vld [vmem:[%s1 + $0x540] sm:$0xff]
      %v496 = vld [vmem:[%s1 + $0x548] sm:$0xff]
      %v497 = vld [vmem:[%s1 + $0x550] sm:$0xff]
      %v498 = vld [vmem:[%s1 + $0x558] sm:$0xff]
      %v499 = vld [vmem:[%s1 + $0x560] sm:$0xff]
      %v500 = vld [vmem:[%s1 + $0x568] sm:$0xff]
      %v501 = vld [vmem:[%s1 + $0x570] sm:$0xff]
      %v502 = vld [vmem:[%s1 + $0x578] sm:$0xff]
      %v503 = vld [vmem:[%s1 + $0x580] sm:$0xff]
      %v504 = vld [vmem:[%s1 + $0x588] sm:$0xff]
      %v505 = vld [vmem:[%s1 + $0x590] sm:$0xff]
      %v506 = vld [vmem:[%s1 + $0x598] sm:$0xff]
      %v507 = vld [vmem:[%s1 + $0x5a0] sm:$0xff]
      %v508 = vld [vmem:[%s1 + $0x5a8] sm:$0xff]
      %v509 = vld [vmem:[%s1 + $0x5b0] sm:$0xff]
      %v510 = vld [vmem:[%s1 + $0x5b8] sm:$0xff]
      %v511 = vld [vmem:[%s1 + $0x5c0] sm:$0xff]
      %v512 = vld [vmem:[%s1 + $0x5c8] sm:$0xff]
      %v513 = vld [vmem:[%s1 + $0x5d0] sm:$0xff]
      %v514 = vld [vmem:[%s1 + $0x5d8] sm:$0xff]
      %v515 = vld [vmem:[%s1 + $0x5e0] sm:$0xff]
      %v516 = vld [vmem:[%s1 + $0x5e8] sm:$0xff]
      %v517 = vld [vmem:[%s1 + $0x5f0] sm:$0xff]
      %v518 = vld [vmem:[%s1 + $0x5f8] sm:$0xff]
      %v519 = vld [vmem:[%s2] sm:$0x7]
      %v521 = vperm.slane %v519, 0
      %v522 = vperm.slane %v519, 1
      %v523 = vperm.slane %v519, 2
      %527 = vmatpush.msra.mxu0 %v372
      %528 = vmatpush.msra.mxu0 %v369
      %529 = vmatpush.msra.mxu0 %v366
      %530 = vmatpush.msra.mxu0 %v363
      %531 = vmatpush.msra.mxu0 %v360
      %532 = vmatpush.msra.mxu0 %v357
      %533 = vmatpush.msra.mxu0 %v354
      %534 = vmatpush.msra.mxu0 %v351
      %535 = vmatpush.msra.mxu0 %v348
      %536 = vmatpush.msra.mxu0 %v345
      %537 = vmatpush.msra.mxu0 %v342
      %538 = vmatpush.msra.mxu0 %v339
      %539 = vmatpush.msra.mxu0 %v336
      %540 = vmatpush.msra.mxu0 %v333
      %541 = vmatpush.msra.mxu0 %v330
      %542 = vmatpush.msra.mxu0 %v327
      %543 = vmatmul.f32.gmra.mxu0 %v319
      %v544 = vpop.f32.mrf.mxu0
      %v545 = vadd.f32 %v521, %v544
      %546 = vmatmul.f32.gmra.mxu0 %v323
      %v547 = vpop.f32.mrf.mxu0
      %v548 = vadd.f32 %v521, %v547
      %549 = vdwg.mxu0
      %550 = vmatpush.msra.mxu0 %v420
      %551 = vmatpush.msra.mxu0 %v417
      %552 = vmatpush.msra.mxu0 %v414
      %553 = vmatpush.msra.mxu0 %v411
      %554 = vmatpush.msra.mxu0 %v408
      %555 = vmatpush.msra.mxu0 %v405
      %556 = vmatpush.msra.mxu0 %v402
      %557 = vmatpush.msra.mxu0 %v399
      %558 = vmatpush.msra.mxu0 %v396
      %559 = vmatpush.msra.mxu0 %v393
      %560 = vmatpush.msra.mxu0 %v390
      %561 = vmatpush.msra.mxu0 %v387
      %562 = vmatpush.msra.mxu0 %v384
      %563 = vmatpush.msra.mxu0 %v381
      %564 = vmatpush.msra.mxu0 %v378
      %565 = vmatpush.msra.mxu0 %v375
      %566 = vmatmul.f32.gmra.mxu0 %v320
      %v567 = vpop.f32.mrf.mxu0
      %v568 = vadd.f32 %v545, %v567
      %569 = vmatmul.f32.gmra.mxu0 %v324
      %v570 = vpop.f32.mrf.mxu0
      %v571 = vadd.f32 %v548, %v570
      %572 = vdwg.mxu0
      %573 = vmatpush.msra.mxu0 %v468
      %574 = vmatpush.msra.mxu0 %v465
      %575 = vmatpush.msra.mxu0 %v462
      %576 = vmatpush.msra.mxu0 %v459
      %577 = vmatpush.msra.mxu0 %v456
      %578 = vmatpush.msra.mxu0 %v453
      %579 = vmatpush.msra.mxu0 %v450
      %580 = vmatpush.msra.mxu0 %v447
      %581 = vmatpush.msra.mxu0 %v444
      %582 = vmatpush.msra.mxu0 %v441
      %583 = vmatpush.msra.mxu0 %v438
      %584 = vmatpush.msra.mxu0 %v435
      %585 = vmatpush.msra.mxu0 %v432
      %586 = vmatpush.msra.mxu0 %v429
      %587 = vmatpush.msra.mxu0 %v426
      %588 = vmatpush.msra.mxu0 %v423
      %589 = vmatmul.f32.gmra.mxu0 %v321
      %v590 = vpop.f32.mrf.mxu0
      %v591 = vadd.f32 %v568, %v590
      %592 = vmatmul.f32.gmra.mxu0 %v325
      %v593 = vpop.f32.mrf.mxu0
      %v594 = vadd.f32 %v571, %v593
      %595 = vdwg.mxu0
      %596 = vmatpush.msra.mxu0 %v516
      %597 = vmatpush.msra.mxu0 %v513
      %598 = vmatpush.msra.mxu0 %v510
      %599 = vmatpush.msra.mxu0 %v507
      %600 = vmatpush.msra.mxu0 %v504
      %601 = vmatpush.msra.mxu0 %v501
      %602 = vmatpush.msra.mxu0 %v498
      %603 = vmatpush.msra.mxu0 %v495
      %604 = vmatpush.msra.mxu0 %v492
      %605 = vmatpush.msra.mxu0 %v489
      %606 = vmatpush.msra.mxu0 %v486
      %607 = vmatpush.msra.mxu0 %v483
      %608 = vmatpush.msra.mxu0 %v480
      %609 = vmatpush.msra.mxu0 %v477
      %610 = vmatpush.msra.mxu0 %v474
      %611 = vmatpush.msra.mxu0 %v471
      %612 = vmatmul.f32.gmra.mxu0 %v322
      %v613 = vpop.f32.mrf.mxu0
      %v614 = vadd.f32 %v591, %v613
      %615 = vmatmul.f32.gmra.mxu0 %v326
      %v616 = vpop.f32.mrf.mxu0
      %v617 = vadd.f32 %v594, %v616
      %618 = vdwg.mxu0
      %619 = vmatpush.msra.mxu0 %v373
      %620 = vmatpush.msra.mxu0 %v370
      %621 = vmatpush.msra.mxu0 %v367
      %622 = vmatpush.msra.mxu0 %v364
      %623 = vmatpush.msra.mxu0 %v361
      %624 = vmatpush.msra.mxu0 %v358
      %625 = vmatpush.msra.mxu0 %v355
      %626 = vmatpush.msra.mxu0 %v352
      %627 = vmatpush.msra.mxu0 %v349
      %628 = vmatpush.msra.mxu0 %v346
      %629 = vmatpush.msra.mxu0 %v343
      %630 = vmatpush.msra.mxu0 %v340
      %631 = vmatpush.msra.mxu0 %v337
      %632 = vmatpush.msra.mxu0 %v334
      %633 = vmatpush.msra.mxu0 %v331
      %634 = vmatpush.msra.mxu0 %v328
      %635 = vmatmul.f32.gmra.mxu0 %v319
      %v636 = vpop.f32.mrf.mxu0
      %v637 = vadd.f32 %v522, %v636
      %638 = vmatmul.f32.gmra.mxu0 %v323
      %v639 = vpop.f32.mrf.mxu0
      %v640 = vadd.f32 %v522, %v639
      %641 = vdwg.mxu0
      %642 = vmatpush.msra.mxu0 %v421
      %643 = vmatpush.msra.mxu0 %v418
      %644 = vmatpush.msra.mxu0 %v415
      %645 = vmatpush.msra.mxu0 %v412
      %646 = vmatpush.msra.mxu0 %v409
      %647 = vmatpush.msra.mxu0 %v406
      %648 = vmatpush.msra.mxu0 %v403
      %649 = vmatpush.msra.mxu0 %v400
      %650 = vmatpush.msra.mxu0 %v397
      %651 = vmatpush.msra.mxu0 %v394
      %652 = vmatpush.msra.mxu0 %v391
      %653 = vmatpush.msra.mxu0 %v388
      %654 = vmatpush.msra.mxu0 %v385
      %655 = vmatpush.msra.mxu0 %v382
      %656 = vmatpush.msra.mxu0 %v379
      %657 = vmatpush.msra.mxu0 %v376
      %658 = vmatmul.f32.gmra.mxu0 %v320
      %v659 = vpop.f32.mrf.mxu0
      %v660 = vadd.f32 %v637, %v659
      %661 = vmatmul.f32.gmra.mxu0 %v324
      %v662 = vpop.f32.mrf.mxu0
      %v663 = vadd.f32 %v640, %v662
      %664 = vdwg.mxu0
      %665 = vmatpush.msra.mxu0 %v469
      %666 = vmatpush.msra.mxu0 %v466
      %667 = vmatpush.msra.mxu0 %v463
      %668 = vmatpush.msra.mxu0 %v460
      %669 = vmatpush.msra.mxu0 %v457
      %670 = vmatpush.msra.mxu0 %v454
      %671 = vmatpush.msra.mxu0 %v451
      %672 = vmatpush.msra.mxu0 %v448
      %673 = vmatpush.msra.mxu0 %v445
      %674 = vmatpush.msra.mxu0 %v442
      %675 = vmatpush.msra.mxu0 %v439
      %676 = vmatpush.msra.mxu0 %v436
      %677 = vmatpush.msra.mxu0 %v433
      %678 = vmatpush.msra.mxu0 %v430
      %679 = vmatpush.msra.mxu0 %v427
      %680 = vmatpush.msra.mxu0 %v424
      %681 = vmatmul.f32.gmra.mxu0 %v321
      %v682 = vpop.f32.mrf.mxu0
      %v683 = vadd.f32 %v660, %v682
      %684 = vmatmul.f32.gmra.mxu0 %v325
      %v685 = vpop.f32.mrf.mxu0
      %v686 = vadd.f32 %v663, %v685
      %687 = vdwg.mxu0
      %688 = vmatpush.msra.mxu0 %v517
      %689 = vmatpush.msra.mxu0 %v514
      %690 = vmatpush.msra.mxu0 %v511
      %691 = vmatpush.msra.mxu0 %v508
      %692 = vmatpush.msra.mxu0 %v505
      %693 = vmatpush.msra.mxu0 %v502
      %694 = vmatpush.msra.mxu0 %v499
      %695 = vmatpush.msra.mxu0 %v496
      %696 = vmatpush.msra.mxu0 %v493
      %697 = vmatpush.msra.mxu0 %v490
      %698 = vmatpush.msra.mxu0 %v487
      %699 = vmatpush.msra.mxu0 %v484
      %700 = vmatpush.msra.mxu0 %v481
      %701 = vmatpush.msra.mxu0 %v478
      %702 = vmatpush.msra.mxu0 %v475
      %703 = vmatpush.msra.mxu0 %v472
      %704 = vmatmul.f32.gmra.mxu0 %v322
      %v705 = vpop.f32.mrf.mxu0
      %v706 = vadd.f32 %v683, %v705
      %707 = vmatmul.f32.gmra.mxu0 %v326
      %v708 = vpop.f32.mrf.mxu0
      %v709 = vadd.f32 %v686, %v708
      %710 = vdwg.mxu0
      %711 = vmatpush.msra.mxu0 %v374
      %712 = vmatpush.msra.mxu0 %v371
      %713 = vmatpush.msra.mxu0 %v368
      %714 = vmatpush.msra.mxu0 %v365
      %715 = vmatpush.msra.mxu0 %v362
      %716 = vmatpush.msra.mxu0 %v359
      %717 = vmatpush.msra.mxu0 %v356
      %718 = vmatpush.msra.mxu0 %v353
      %719 = vmatpush.msra.mxu0 %v350
      %720 = vmatpush.msra.mxu0 %v347
      %721 = vmatpush.msra.mxu0 %v344
      %722 = vmatpush.msra.mxu0 %v341
      %723 = vmatpush.msra.mxu0 %v338
      %724 = vmatpush.msra.mxu0 %v335
      %725 = vmatpush.msra.mxu0 %v332
      %726 = vmatpush.msra.mxu0 %v329
      %727 = vmatmul.f32.gmra.mxu0 %v319
      %v728 = vpop.f32.mrf.mxu0
      %v729 = vadd.f32 %v523, %v728
      %730 = vmatmul.f32.gmra.mxu0 %v323
      %v731 = vpop.f32.mrf.mxu0
      %v732 = vadd.f32 %v523, %v731
      %733 = vdwg.mxu0
      %734 = vmatpush.msra.mxu0 %v422
      %735 = vmatpush.msra.mxu0 %v419
      %736 = vmatpush.msra.mxu0 %v416
      %737 = vmatpush.msra.mxu0 %v413
      %738 = vmatpush.msra.mxu0 %v410
      %739 = vmatpush.msra.mxu0 %v407
      %740 = vmatpush.msra.mxu0 %v404
      %741 = vmatpush.msra.mxu0 %v401
      %742 = vmatpush.msra.mxu0 %v398
      %743 = vmatpush.msra.mxu0 %v395
      %744 = vmatpush.msra.mxu0 %v392
      %745 = vmatpush.msra.mxu0 %v389
      %746 = vmatpush.msra.mxu0 %v386
      %747 = vmatpush.msra.mxu0 %v383
      %748 = vmatpush.msra.mxu0 %v380
      %749 = vmatpush.msra.mxu0 %v377
      %750 = vmatmul.f32.gmra.mxu0 %v320
      %v751 = vpop.f32.mrf.mxu0
      %v752 = vadd.f32 %v729, %v751
      %753 = vmatmul.f32.gmra.mxu0 %v324
      %v754 = vpop.f32.mrf.mxu0
      %v755 = vadd.f32 %v732, %v754
      %756 = vdwg.mxu0
      %757 = vmatpush.msra.mxu0 %v470
      %758 = vmatpush.msra.mxu0 %v467
      %759 = vmatpush.msra.mxu0 %v464
      %760 = vmatpush.msra.mxu0 %v461
      %761 = vmatpush.msra.mxu0 %v458
      %762 = vmatpush.msra.mxu0 %v455
      %763 = vmatpush.msra.mxu0 %v452
      %764 = vmatpush.msra.mxu0 %v449
      %765 = vmatpush.msra.mxu0 %v446
      %766 = vmatpush.msra.mxu0 %v443
      %767 = vmatpush.msra.mxu0 %v440
      %768 = vmatpush.msra.mxu0 %v437
      %769 = vmatpush.msra.mxu0 %v434
      %770 = vmatpush.msra.mxu0 %v431
      %771 = vmatpush.msra.mxu0 %v428
      %772 = vmatpush.msra.mxu0 %v425
      %773 = vmatmul.f32.gmra.mxu0 %v321
      %v774 = vpop.f32.mrf.mxu0
      %v775 = vadd.f32 %v752, %v774
      %776 = vmatmul.f32.gmra.mxu0 %v325
      %v777 = vpop.f32.mrf.mxu0
      %v778 = vadd.f32 %v755, %v777
      %779 = vdwg.mxu0
      %780 = vmatpush.msra.mxu0 %v518
      %781 = vmatpush.msra.mxu0 %v515
      %782 = vmatpush.msra.mxu0 %v512
      %783 = vmatpush.msra.mxu0 %v509
      %784 = vmatpush.msra.mxu0 %v506
      %785 = vmatpush.msra.mxu0 %v503
      %786 = vmatpush.msra.mxu0 %v500
      %787 = vmatpush.msra.mxu0 %v497
      %788 = vmatpush.msra.mxu0 %v494
      %789 = vmatpush.msra.mxu0 %v491
      %790 = vmatpush.msra.mxu0 %v488
      %791 = vmatpush.msra.mxu0 %v485
      %792 = vmatpush.msra.mxu0 %v482
      %793 = vmatpush.msra.mxu0 %v479
      %794 = vmatpush.msra.mxu0 %v476
      %795 = vmatpush.msra.mxu0 %v473
      %796 = vmatmul.f32.gmra.mxu0 %v322
      %v797 = vpop.f32.mrf.mxu0
      %v798 = vadd.f32 %v775, %v797
      %799 = vmatmul.f32.gmra.mxu0 %v326
      %v800 = vpop.f32.mrf.mxu0
      %v801 = vadd.f32 %v778, %v800
      %802 = vdwg.mxu0
      %v803 = vmax.f32 %v614, 0.0
      %v804 = vmax.f32 %v706, 0.0
      %v805 = vmax.f32 %v798, 0.0
      %v806 = vmax.f32 %v617, 0.0
      %v807 = vmax.f32 %v709, 0.0
      %v808 = vmax.f32 %v801, 0.0
      %v809 = vlaneseq
      %vm810 = vcmp.ge.s32.totalorder %v809, 0
      %vm811 = vcmp.lt.s32.totalorder %v809, 288
      %vm812 = vmand %vm810, %vm811
      %813 = vst.msk [vmem:[#allocation2] ss:$8 sm:$0x7] %vm812, 0.0
      %814 = vst.msk [vmem:[#allocation2] ss:$8 sm:$0x0] %vm812, 0.0
      %s815 = scalar_lea.vmem [#allocation2], 49
      %816 = vst.msk [vmem:[%s815] ss:$8 sm:$0x7] %vm812, 0.0
      %817 = vst.msk [vmem:[%s815] ss:$8 sm:$0x0] %vm812, 0.0
      %vm824 = vcmask 1040384
      %v825 = vrot.slane %v803, 7
      %v826 = vrot.slane %v804, 7
      %v827 = vrot.slane %v805, 7
      %v828 = vrot.slane %v806, 7
      %v829 = vsel %vm824, %v825, %v828
      %v830 = vrot.slane %v807, 7
      %v831 = vsel %vm824, %v826, %v830
      %v832 = vrot.slane %v808, 7
      %v833 = vsel %vm824, %v827, %v832
      %843 = vst [vmem:[#allocation2] sm:$0xfe] %v825
      %844 = vst [vmem:[#allocation2 + $0x8] sm:$0xfe] %v826
      %vm845 = vcmask 261121
      %846 = vst.msk [vmem:[#allocation2 + $0x10] sm:$0xfe] %vm845, %v827
      %847 = vst [vmem:[#allocation2 + $0x18] sm:$0xff] %v829
      %848 = vst [vmem:[#allocation2 + $0x20] sm:$0xff] %v831
      %vm849 = vcmask 261120
      %850 = vst.msk [vmem:[#allocation2 + $0x28] sm:$0xff] %vm849, %v833
      %851 = vst [vmem:[#allocation2 + $0x30] sm:$0x1] %v828
      %852 = vst [vmem:[#allocation2 + $0x38] sm:$0x1] %v830
      %vm853 = vcmask 253952
      %854 = vst.msk [vmem:[#allocation2 + $0x40] sm:$0x1] %vm853, %v832
      %v855 = vld [vmem:[#allocation2] sm:$0xff]
      %v856 = vld [vmem:[#allocation2 + $0x8] sm:$0xff]
      %v857 = vld [vmem:[#allocation2 + $0x10] sm:$0xff]
      %v858 = vld [vmem:[#allocation2 + $0x18] sm:$0xff]
      %v859 = vld [vmem:[#allocation2 + $0x20] sm:$0xff]
      %v860 = vld [vmem:[#allocation2 + $0x28] sm:$0xff]
      %v861 = vld [vmem:[%s3] sm:$0xff]
      %v862 = vld [vmem:[%s3 + $0x8] sm:$0xff]
      %v863 = vld [vmem:[%s3 + $0x10] sm:$0xff]
      %v864 = vld [vmem:[%s3 + $0x18] sm:$0xff]
      %v865 = vld [vmem:[%s3 + $0x20] sm:$0xff]
      %v866 = vld [vmem:[%s3 + $0x28] sm:$0xff]
      %v867 = vld [vmem:[%s3 + $0x30] sm:$0xff]
      %v868 = vld [vmem:[%s3 + $0x38] sm:$0xff]
      %v869 = vld [vmem:[%s3 + $0x40] sm:$0xff]
      %v870 = vld [vmem:[%s3 + $0x48] sm:$0xff]
      %v871 = vld [vmem:[%s3 + $0x50] sm:$0xff]
      %v872 = vld [vmem:[%s3 + $0x58] sm:$0xff]
      %v873 = vld [vmem:[%s3 + $0x60] sm:$0xff]
      %v874 = vld [vmem:[%s3 + $0x68] sm:$0xff]
      %v875 = vld [vmem:[%s3 + $0x70] sm:$0xff]
      %v876 = vld [vmem:[%s3 + $0x78] sm:$0xff]
      %v877 = vld [vmem:[%s3 + $0x80] sm:$0xff]
      %v878 = vld [vmem:[%s3 + $0x88] sm:$0xff]
      %v879 = vld [vmem:[%s3 + $0x90] sm:$0xff]
      %v880 = vld [vmem:[%s3 + $0x98] sm:$0xff]
      %v881 = vld [vmem:[%s3 + $0xa0] sm:$0xff]
      %v882 = vld [vmem:[%s3 + $0xa8] sm:$0xff]
      %v883 = vld [vmem:[%s3 + $0xb0] sm:$0xff]
      %v884 = vld [vmem:[%s3 + $0xb8] sm:$0xff]
      %v885 = vld [vmem:[%s3 + $0xc0] sm:$0xff]
      %v886 = vld [vmem:[%s3 + $0xc8] sm:$0xff]
      %v887 = vld [vmem:[%s3 + $0xd0] sm:$0xff]
      %v888 = vld [vmem:[%s3 + $0xd8] sm:$0xff]
      %v889 = vld [vmem:[%s3 + $0xe0] sm:$0xff]
      %v890 = vld [vmem:[%s3 + $0xe8] sm:$0xff]
      %v891 = vld [vmem:[%s3 + $0xf0] sm:$0xff]
      %v892 = vld [vmem:[%s3 + $0xf8] sm:$0xff]
      %v893 = vld [vmem:[%s3 + $0x100] sm:$0xff]
      %v894 = vld [vmem:[%s3 + $0x108] sm:$0xff]
      %v895 = vld [vmem:[%s3 + $0x110] sm:$0xff]
      %v896 = vld [vmem:[%s3 + $0x118] sm:$0xff]
      %v897 = vld [vmem:[%s3 + $0x120] sm:$0xff]
      %v898 = vld [vmem:[%s3 + $0x128] sm:$0xff]
      %v899 = vld [vmem:[%s3 + $0x130] sm:$0xff]
      %v900 = vld [vmem:[%s3 + $0x138] sm:$0xff]
      %v901 = vld [vmem:[%s3 + $0x140] sm:$0xff]
      %v902 = vld [vmem:[%s3 + $0x148] sm:$0xff]
      %v903 = vld [vmem:[%s3 + $0x150] sm:$0xff]
      %v904 = vld [vmem:[%s3 + $0x158] sm:$0xff]
      %v905 = vld [vmem:[%s3 + $0x160] sm:$0xff]
      %v906 = vld [vmem:[%s3 + $0x168] sm:$0xff]
      %v907 = vld [vmem:[%s3 + $0x170] sm:$0xff]
      %v908 = vld [vmem:[%s3 + $0x178] sm:$0xff]
      %v909 = vld [vmem:[%s3 + $0x180] sm:$0xff]
      %v910 = vld [vmem:[%s3 + $0x188] sm:$0xff]
      %v911 = vld [vmem:[%s3 + $0x190] sm:$0xff]
      %v912 = vld [vmem:[%s3 + $0x198] sm:$0xff]
      %v913 = vld [vmem:[%s3 + $0x1a0] sm:$0xff]
      %v914 = vld [vmem:[%s3 + $0x1a8] sm:$0xff]
      %v915 = vld [vmem:[%s3 + $0x1b0] sm:$0xff]
      %v916 = vld [vmem:[%s3 + $0x1b8] sm:$0xff]
      %v917 = vld [vmem:[%s3 + $0x1c0] sm:$0xff]
      %v918 = vld [vmem:[%s3 + $0x1c8] sm:$0xff]
      %v919 = vld [vmem:[%s3 + $0x1d0] sm:$0xff]
      %v920 = vld [vmem:[%s3 + $0x1d8] sm:$0xff]
      %v921 = vld [vmem:[%s3 + $0x1e0] sm:$0xff]
      %v922 = vld [vmem:[%s3 + $0x1e8] sm:$0xff]
      %v923 = vld [vmem:[%s3 + $0x1f0] sm:$0xff]
      %v924 = vld [vmem:[%s3 + $0x1f8] sm:$0xff]
      %v925 = vld [vmem:[%s3 + $0x200] sm:$0xff]
      %v926 = vld [vmem:[%s3 + $0x208] sm:$0xff]
      %v927 = vld [vmem:[%s3 + $0x210] sm:$0xff]
      %v928 = vld [vmem:[%s3 + $0x218] sm:$0xff]
      %v929 = vld [vmem:[%s3 + $0x220] sm:$0xff]
      %v930 = vld [vmem:[%s3 + $0x228] sm:$0xff]
      %v931 = vld [vmem:[%s3 + $0x230] sm:$0xff]
      %v932 = vld [vmem:[%s3 + $0x238] sm:$0xff]
      %v933 = vld [vmem:[%s3 + $0x240] sm:$0xff]
      %v934 = vld [vmem:[%s3 + $0x248] sm:$0xff]
      %v935 = vld [vmem:[%s3 + $0x250] sm:$0xff]
      %v936 = vld [vmem:[%s3 + $0x258] sm:$0xff]
      %v937 = vld [vmem:[%s3 + $0x260] sm:$0xff]
      %v938 = vld [vmem:[%s3 + $0x268] sm:$0xff]
      %v939 = vld [vmem:[%s3 + $0x270] sm:$0xff]
      %v940 = vld [vmem:[%s3 + $0x278] sm:$0xff]
      %v941 = vld [vmem:[%s3 + $0x280] sm:$0xff]
      %v942 = vld [vmem:[%s3 + $0x288] sm:$0xff]
      %v943 = vld [vmem:[%s3 + $0x290] sm:$0xff]
      %v944 = vld [vmem:[%s3 + $0x298] sm:$0xff]
      %v945 = vld [vmem:[%s3 + $0x2a0] sm:$0xff]
      %v946 = vld [vmem:[%s3 + $0x2a8] sm:$0xff]
      %v947 = vld [vmem:[%s3 + $0x2b0] sm:$0xff]
      %v948 = vld [vmem:[%s3 + $0x2b8] sm:$0xff]
      %v949 = vld [vmem:[%s3 + $0x2c0] sm:$0xff]
      %v950 = vld [vmem:[%s3 + $0x2c8] sm:$0xff]
      %v951 = vld [vmem:[%s3 + $0x2d0] sm:$0xff]
      %v952 = vld [vmem:[%s3 + $0x2d8] sm:$0xff]
      %v953 = vld [vmem:[%s3 + $0x2e0] sm:$0xff]
      %v954 = vld [vmem:[%s3 + $0x2e8] sm:$0xff]
      %v955 = vld [vmem:[%s3 + $0x2f0] sm:$0xff]
      %v956 = vld [vmem:[%s3 + $0x2f8] sm:$0xff]
      %v957 = vld [vmem:[%s3 + $0x300] sm:$0xff]
      %v958 = vld [vmem:[%s3 + $0x308] sm:$0xff]
      %v959 = vld [vmem:[%s3 + $0x310] sm:$0xff]
      %v960 = vld [vmem:[%s3 + $0x318] sm:$0xff]
      %v961 = vld [vmem:[%s3 + $0x320] sm:$0xff]
      %v962 = vld [vmem:[%s3 + $0x328] sm:$0xff]
      %v963 = vld [vmem:[%s3 + $0x330] sm:$0xff]
      %v964 = vld [vmem:[%s3 + $0x338] sm:$0xff]
      %v965 = vld [vmem:[%s3 + $0x340] sm:$0xff]
      %v966 = vld [vmem:[%s3 + $0x348] sm:$0xff]
      %v967 = vld [vmem:[%s3 + $0x350] sm:$0xff]
      %v968 = vld [vmem:[%s3 + $0x358] sm:$0xff]
      %v969 = vld [vmem:[#allocation2] sm:$0xfe]
      %v970 = vld [vmem:[#allocation2 + $0x8] sm:$0xfe]
      %v971 = vld [vmem:[#allocation2 + $0x10] sm:$0xfe]
      %v972 = vld [vmem:[#allocation2 + $0x30] sm:$0x1]
      %v973 = vld [vmem:[#allocation2 + $0x38] sm:$0x1]
      %v974 = vld [vmem:[#allocation2 + $0x40] sm:$0x1]
      %s975 = scalar_lea.vmem %s3, 864
      %v976 = vld [vmem:[%s975] sm:$0xff]
      %v977 = vld [vmem:[%s975 + $0x8] sm:$0xff]
      %v978 = vld [vmem:[%s975 + $0x10] sm:$0xff]
      %v979 = vld [vmem:[%s975 + $0x18] sm:$0xff]
      %v980 = vld [vmem:[%s975 + $0x20] sm:$0xff]
      %v981 = vld [vmem:[%s975 + $0x28] sm:$0xff]
      %v982 = vld [vmem:[%s975 + $0x30] sm:$0xff]
      %v983 = vld [vmem:[%s975 + $0x38] sm:$0xff]
      %v984 = vld [vmem:[%s975 + $0x40] sm:$0xff]
      %v985 = vld [vmem:[%s975 + $0x48] sm:$0xff]
      %v986 = vld [vmem:[%s975 + $0x50] sm:$0xff]
      %v987 = vld [vmem:[%s975 + $0x58] sm:$0xff]
      %v988 = vld [vmem:[%s975 + $0x60] sm:$0xff]
      %v989 = vld [vmem:[%s975 + $0x68] sm:$0xff]
      %v990 = vld [vmem:[%s975 + $0x70] sm:$0xff]
      %v991 = vld [vmem:[%s975 + $0x78] sm:$0xff]
      %v992 = vld [vmem:[%s975 + $0x80] sm:$0xff]
      %v993 = vld [vmem:[%s975 + $0x88] sm:$0xff]
      %v994 = vld [vmem:[%s975 + $0x90] sm:$0xff]
      %v995 = vld [vmem:[%s975 + $0x98] sm:$0xff]
      %v996 = vld [vmem:[%s975 + $0xa0] sm:$0xff]
      %v997 = vld [vmem:[%s975 + $0xa8] sm:$0xff]
      %v998 = vld [vmem:[%s975 + $0xb0] sm:$0xff]
      %v999 = vld [vmem:[%s975 + $0xb8] sm:$0xff]
      %v1000 = vld [vmem:[%s975 + $0xc0] sm:$0xff]
      %v1001 = vld [vmem:[%s975 + $0xc8] sm:$0xff]
      %v1002 = vld [vmem:[%s975 + $0xd0] sm:$0xff]
      %v1003 = vld [vmem:[%s975 + $0xd8] sm:$0xff]
      %v1004 = vld [vmem:[%s975 + $0xe0] sm:$0xff]
      %v1005 = vld [vmem:[%s975 + $0xe8] sm:$0xff]
      %v1006 = vld [vmem:[%s975 + $0xf0] sm:$0xff]
      %v1007 = vld [vmem:[%s975 + $0xf8] sm:$0xff]
      %v1008 = vld [vmem:[%s975 + $0x100] sm:$0xff]
      %v1009 = vld [vmem:[%s975 + $0x108] sm:$0xff]
      %v1010 = vld [vmem:[%s975 + $0x110] sm:$0xff]
      %v1011 = vld [vmem:[%s975 + $0x118] sm:$0xff]
      %v1012 = vld [vmem:[%s975 + $0x120] sm:$0xff]
      %v1013 = vld [vmem:[%s975 + $0x128] sm:$0xff]
      %v1014 = vld [vmem:[%s975 + $0x130] sm:$0xff]
      %v1015 = vld [vmem:[%s975 + $0x138] sm:$0xff]
      %v1016 = vld [vmem:[%s975 + $0x140] sm:$0xff]
      %v1017 = vld [vmem:[%s975 + $0x148] sm:$0xff]
      %v1018 = vld [vmem:[%s975 + $0x150] sm:$0xff]
      %v1019 = vld [vmem:[%s975 + $0x158] sm:$0xff]
      %v1020 = vld [vmem:[%s975 + $0x160] sm:$0xff]
      %v1021 = vld [vmem:[%s975 + $0x168] sm:$0xff]
      %v1022 = vld [vmem:[%s975 + $0x170] sm:$0xff]
      %v1023 = vld [vmem:[%s975 + $0x178] sm:$0xff]
      %v1024 = vld [vmem:[%s975 + $0x180] sm:$0xff]
      %v1025 = vld [vmem:[%s975 + $0x188] sm:$0xff]
      %v1026 = vld [vmem:[%s975 + $0x190] sm:$0xff]
      %v1027 = vld [vmem:[%s975 + $0x198] sm:$0xff]
      %v1028 = vld [vmem:[%s975 + $0x1a0] sm:$0xff]
      %v1029 = vld [vmem:[%s975 + $0x1a8] sm:$0xff]
      %v1030 = vld [vmem:[%s975 + $0x1b0] sm:$0xff]
      %v1031 = vld [vmem:[%s975 + $0x1b8] sm:$0xff]
      %v1032 = vld [vmem:[%s975 + $0x1c0] sm:$0xff]
      %v1033 = vld [vmem:[%s975 + $0x1c8] sm:$0xff]
      %v1034 = vld [vmem:[%s975 + $0x1d0] sm:$0xff]
      %v1035 = vld [vmem:[%s975 + $0x1d8] sm:$0xff]
      %v1036 = vld [vmem:[%s975 + $0x1e0] sm:$0xff]
      %v1037 = vld [vmem:[%s975 + $0x1e8] sm:$0xff]
      %v1038 = vld [vmem:[%s975 + $0x1f0] sm:$0xff]
      %v1039 = vld [vmem:[%s975 + $0x1f8] sm:$0xff]
      %v1040 = vld [vmem:[%s975 + $0x200] sm:$0xff]
      %v1041 = vld [vmem:[%s975 + $0x208] sm:$0xff]
      %v1042 = vld [vmem:[%s975 + $0x210] sm:$0xff]
      %v1043 = vld [vmem:[%s975 + $0x218] sm:$0xff]
      %v1044 = vld [vmem:[%s975 + $0x220] sm:$0xff]
      %v1045 = vld [vmem:[%s975 + $0x228] sm:$0xff]
      %v1046 = vld [vmem:[%s975 + $0x230] sm:$0xff]
      %v1047 = vld [vmem:[%s975 + $0x238] sm:$0xff]
      %v1048 = vld [vmem:[%s975 + $0x240] sm:$0xff]
      %v1049 = vld [vmem:[%s975 + $0x248] sm:$0xff]
      %v1050 = vld [vmem:[%s975 + $0x250] sm:$0xff]
      %v1051 = vld [vmem:[%s975 + $0x258] sm:$0xff]
      %v1052 = vld [vmem:[%s975 + $0x260] sm:$0xff]
      %v1053 = vld [vmem:[%s975 + $0x268] sm:$0xff]
      %v1054 = vld [vmem:[%s975 + $0x270] sm:$0xff]
      %v1055 = vld [vmem:[%s975 + $0x278] sm:$0xff]
      %v1056 = vld [vmem:[%s975 + $0x280] sm:$0xff]
      %v1057 = vld [vmem:[%s975 + $0x288] sm:$0xff]
      %v1058 = vld [vmem:[%s975 + $0x290] sm:$0xff]
      %v1059 = vld [vmem:[%s975 + $0x298] sm:$0xff]
      %v1060 = vld [vmem:[%s975 + $0x2a0] sm:$0xff]
      %v1061 = vld [vmem:[%s975 + $0x2a8] sm:$0xff]
      %v1062 = vld [vmem:[%s975 + $0x2b0] sm:$0xff]
      %v1063 = vld [vmem:[%s975 + $0x2b8] sm:$0xff]
      %v1064 = vld [vmem:[%s975 + $0x2c0] sm:$0xff]
      %v1065 = vld [vmem:[%s975 + $0x2c8] sm:$0xff]
      %v1066 = vld [vmem:[%s975 + $0x2d0] sm:$0xff]
      %v1067 = vld [vmem:[%s975 + $0x2d8] sm:$0xff]
      %v1068 = vld [vmem:[%s975 + $0x2e0] sm:$0xff]
      %v1069 = vld [vmem:[%s975 + $0x2e8] sm:$0xff]
      %v1070 = vld [vmem:[%s975 + $0x2f0] sm:$0xff]
      %v1071 = vld [vmem:[%s975 + $0x2f8] sm:$0xff]
      %v1072 = vld [vmem:[%s975 + $0x300] sm:$0xff]
      %v1073 = vld [vmem:[%s975 + $0x308] sm:$0xff]
      %v1074 = vld [vmem:[%s975 + $0x310] sm:$0xff]
      %v1075 = vld [vmem:[%s975 + $0x318] sm:$0xff]
      %v1076 = vld [vmem:[%s975 + $0x320] sm:$0xff]
      %v1077 = vld [vmem:[%s975 + $0x328] sm:$0xff]
      %v1078 = vld [vmem:[%s975 + $0x330] sm:$0xff]
      %v1079 = vld [vmem:[%s975 + $0x338] sm:$0xff]
      %v1080 = vld [vmem:[%s975 + $0x340] sm:$0xff]
      %v1081 = vld [vmem:[%s975 + $0x348] sm:$0xff]
      %v1082 = vld [vmem:[%s975 + $0x350] sm:$0xff]
      %v1083 = vld [vmem:[%s975 + $0x358] sm:$0xff]
      %vm1093 = vcmask 1046528
      %v1094 = vrot.slane %v969, 1
      %v1095 = vrot.slane %v858, 1
      %v1096 = vsel %vm1093, %v1094, %v1095
      %v1097 = vrot.slane %v970, 1
      %v1098 = vrot.slane %v859, 1
      %v1099 = vsel %vm1093, %v1097, %v1098
      %v1100 = vrot.slane %v971, 1
      %v1101 = vrot.slane %v860, 1
      %v1102 = vsel %vm1093, %v1100, %v1101
      %v1103 = vrot.slane %v972, 1
      %v1104 = vsel %vm1093, %v1095, %v1103
      %v1105 = vrot.slane %v973, 1
      %v1106 = vsel %vm1093, %v1098, %v1105
      %v1107 = vrot.slane %v974, 1
      %v1108 = vsel %vm1093, %v1101, %v1107
      %v1113 = vsel %vm849, %v1102, 0
      %v1115 = vsel %vm849, %v1108, 0
      %1117 = vmatpush.msra.mxu0 %v1021
      %1118 = vmatpush.msra.mxu0 %v1018
      %1119 = vmatpush.msra.mxu0 %v1015
      %1120 = vmatpush.msra.mxu0 %v1012
      %1121 = vmatpush.msra.mxu0 %v1009
      %1122 = vmatpush.msra.mxu0 %v1006
      %1123 = vmatpush.msra.mxu0 %v1003
      %1124 = vmatpush.msra.mxu0 %v1000
      %1125 = vmatpush.msra.mxu0 %v997
      %1126 = vmatpush.msra.mxu0 %v994
      %1127 = vmatpush.msra.mxu0 %v991
      %1128 = vmatpush.msra.mxu0 %v988
      %1129 = vmatpush.msra.mxu0 %v985
      %1130 = vmatpush.msra.mxu0 %v982
      %1131 = vmatpush.msra.mxu0 %v979
      %1132 = vmatpush.msra.mxu0 %v976
      %1133 = vmatmul.f32.gmra.mxu0 %v1096
      %v1134 = vpop.f32.mrf.mxu0
      %v1135 = vadd.f32 0.0, %v1134
      %1136 = vmatmul.f32.gmra.mxu0 %v1104
      %v1137 = vpop.f32.mrf.mxu0
      %v1138 = vadd.f32 0.0, %v1137
      %1139 = vdwg.mxu0
      %1140 = vmatpush.msra.mxu0 %v1069
      %1141 = vmatpush.msra.mxu0 %v1066
      %1142 = vmatpush.msra.mxu0 %v1063
      %1143 = vmatpush.msra.mxu0 %v1060
      %1144 = vmatpush.msra.mxu0 %v1057
      %1145 = vmatpush.msra.mxu0 %v1054
      %1146 = vmatpush.msra.mxu0 %v1051
      %1147 = vmatpush.msra.mxu0 %v1048
      %1148 = vmatpush.msra.mxu0 %v1045
      %1149 = vmatpush.msra.mxu0 %v1042
      %1150 = vmatpush.msra.mxu0 %v1039
      %1151 = vmatpush.msra.mxu0 %v1036
      %1152 = vmatpush.msra.mxu0 %v1033
      %1153 = vmatpush.msra.mxu0 %v1030
      %1154 = vmatpush.msra.mxu0 %v1027
      %1155 = vmatpush.msra.mxu0 %v1024
      %1156 = vmatmul.f32.gmra.mxu0 %v1099
      %v1157 = vpop.f32.mrf.mxu0
      %v1158 = vadd.f32 %v1135, %v1157
      %1159 = vmatmul.f32.gmra.mxu0 %v1106
      %v1160 = vpop.f32.mrf.mxu0
      %v1161 = vadd.f32 %v1138, %v1160
      %1162 = vdwg.mxu0
      %1163 = vmatpush.msra.mxu0 0.0
      %1164 = vmatpush.msra.mxu0 0.0
      %1165 = vmatpush.msra.mxu0 0.0
      %1166 = vmatpush.msra.mxu0 0.0
      %1167 = vmatpush.msra.mxu0 0.0
      %1168 = vmatpush.msra.mxu0 0.0
      %1169 = vmatpush.msra.mxu0 0.0
      %1170 = vmatpush.msra.mxu0 0.0
      %1171 = vmatpush.msra.mxu0 0.0
      %1172 = vmatpush.msra.mxu0 0.0
      %1173 = vmatpush.msra.mxu0 0.0
      %1174 = vmatpush.msra.mxu0 0.0
      %1175 = vmatpush.msra.mxu0 %v1081
      %1176 = vmatpush.msra.mxu0 %v1078
      %1177 = vmatpush.msra.mxu0 %v1075
      %1178 = vmatpush.msra.mxu0 %v1072
      %1179 = vmatmul.f32.gmra.mxu0 %v1113
      %v1180 = vpop.f32.mrf.mxu0
      %v1181 = vadd.f32 %v1158, %v1180
      %1182 = vmatmul.f32.gmra.mxu0 %v1115
      %v1183 = vpop.f32.mrf.mxu0
      %v1184 = vadd.f32 %v1161, %v1183
      %1185 = vdwg.mxu0
      %1186 = vmatpush.msra.mxu0 %v1022
      %1187 = vmatpush.msra.mxu0 %v1019
      %1188 = vmatpush.msra.mxu0 %v1016
      %1189 = vmatpush.msra.mxu0 %v1013
      %1190 = vmatpush.msra.mxu0 %v1010
      %1191 = vmatpush.msra.mxu0 %v1007
      %1192 = vmatpush.msra.mxu0 %v1004
      %1193 = vmatpush.msra.mxu0 %v1001
      %1194 = vmatpush.msra.mxu0 %v998
      %1195 = vmatpush.msra.mxu0 %v995
      %1196 = vmatpush.msra.mxu0 %v992
      %1197 = vmatpush.msra.mxu0 %v989
      %1198 = vmatpush.msra.mxu0 %v986
      %1199 = vmatpush.msra.mxu0 %v983
      %1200 = vmatpush.msra.mxu0 %v980
      %1201 = vmatpush.msra.mxu0 %v977
      %1202 = vmatmul.f32.gmra.mxu0 %v1096
      %v1203 = vpop.f32.mrf.mxu0
      %v1204 = vadd.f32 0.0, %v1203
      %1205 = vmatmul.f32.gmra.mxu0 %v1104
      %v1206 = vpop.f32.mrf.mxu0
      %v1207 = vadd.f32 0.0, %v1206
      %1208 = vdwg.mxu0
      %1209 = vmatpush.msra.mxu0 %v1070
      %1210 = vmatpush.msra.mxu0 %v1067
      %1211 = vmatpush.msra.mxu0 %v1064
      %1212 = vmatpush.msra.mxu0 %v1061
      %1213 = vmatpush.msra.mxu0 %v1058
      %1214 = vmatpush.msra.mxu0 %v1055
      %1215 = vmatpush.msra.mxu0 %v1052
      %1216 = vmatpush.msra.mxu0 %v1049
      %1217 = vmatpush.msra.mxu0 %v1046
      %1218 = vmatpush.msra.mxu0 %v1043
      %1219 = vmatpush.msra.mxu0 %v1040
      %1220 = vmatpush.msra.mxu0 %v1037
      %1221 = vmatpush.msra.mxu0 %v1034
      %1222 = vmatpush.msra.mxu0 %v1031
      %1223 = vmatpush.msra.mxu0 %v1028
      %1224 = vmatpush.msra.mxu0 %v1025
      %1225 = vmatmul.f32.gmra.mxu0 %v1099
      %v1226 = vpop.f32.mrf.mxu0
      %v1227 = vadd.f32 %v1204, %v1226
      %1228 = vmatmul.f32.gmra.mxu0 %v1106
      %v1229 = vpop.f32.mrf.mxu0
      %v1230 = vadd.f32 %v1207, %v1229
      %1231 = vdwg.mxu0
      %1232 = vmatpush.msra.mxu0 0.0
      %1233 = vmatpush.msra.mxu0 0.0
      %1234 = vmatpush.msra.mxu0 0.0
      %1235 = vmatpush.msra.mxu0 0.0
      %1236 = vmatpush.msra.mxu0 0.0
      %1237 = vmatpush.msra.mxu0 0.0
      %1238 = vmatpush.msra.mxu0 0.0
      %1239 = vmatpush.msra.mxu0 0.0
      %1240 = vmatpush.msra.mxu0 0.0
      %1241 = vmatpush.msra.mxu0 0.0
      %1242 = vmatpush.msra.mxu0 0.0
      %1243 = vmatpush.msra.mxu0 0.0
      %1244 = vmatpush.msra.mxu0 %v1082
      %1245 = vmatpush.msra.mxu0 %v1079
      %1246 = vmatpush.msra.mxu0 %v1076
      %1247 = vmatpush.msra.mxu0 %v1073
      %1248 = vmatmul.f32.gmra.mxu0 %v1113
      %v1249 = vpop.f32.mrf.mxu0
      %v1250 = vadd.f32 %v1227, %v1249
      %1251 = vmatmul.f32.gmra.mxu0 %v1115
      %v1252 = vpop.f32.mrf.mxu0
      %v1253 = vadd.f32 %v1230, %v1252
      %1254 = vdwg.mxu0
      %1255 = vmatpush.msra.mxu0 %v1023
      %1256 = vmatpush.msra.mxu0 %v1020
      %1257 = vmatpush.msra.mxu0 %v1017
      %1258 = vmatpush.msra.mxu0 %v1014
      %1259 = vmatpush.msra.mxu0 %v1011
      %1260 = vmatpush.msra.mxu0 %v1008
      %1261 = vmatpush.msra.mxu0 %v1005
      %1262 = vmatpush.msra.mxu0 %v1002
      %1263 = vmatpush.msra.mxu0 %v999
      %1264 = vmatpush.msra.mxu0 %v996
      %1265 = vmatpush.msra.mxu0 %v993
      %1266 = vmatpush.msra.mxu0 %v990
      %1267 = vmatpush.msra.mxu0 %v987
      %1268 = vmatpush.msra.mxu0 %v984
      %1269 = vmatpush.msra.mxu0 %v981
      %1270 = vmatpush.msra.mxu0 %v978
      %1271 = vmatmul.f32.gmra.mxu0 %v1096
      %v1272 = vpop.f32.mrf.mxu0
      %v1273 = vadd.f32 0.0, %v1272
      %1274 = vmatmul.f32.gmra.mxu0 %v1104
      %v1275 = vpop.f32.mrf.mxu0
      %v1276 = vadd.f32 0.0, %v1275
      %1277 = vdwg.mxu0
      %1278 = vmatpush.msra.mxu0 %v1071
      %1279 = vmatpush.msra.mxu0 %v1068
      %1280 = vmatpush.msra.mxu0 %v1065
      %1281 = vmatpush.msra.mxu0 %v1062
      %1282 = vmatpush.msra.mxu0 %v1059
      %1283 = vmatpush.msra.mxu0 %v1056
      %1284 = vmatpush.msra.mxu0 %v1053
      %1285 = vmatpush.msra.mxu0 %v1050
      %1286 = vmatpush.msra.mxu0 %v1047
      %1287 = vmatpush.msra.mxu0 %v1044
      %1288 = vmatpush.msra.mxu0 %v1041
      %1289 = vmatpush.msra.mxu0 %v1038
      %1290 = vmatpush.msra.mxu0 %v1035
      %1291 = vmatpush.msra.mxu0 %v1032
      %1292 = vmatpush.msra.mxu0 %v1029
      %1293 = vmatpush.msra.mxu0 %v1026
      %1294 = vmatmul.f32.gmra.mxu0 %v1099
      %v1295 = vpop.f32.mrf.mxu0
      %v1296 = vadd.f32 %v1273, %v1295
      %1297 = vmatmul.f32.gmra.mxu0 %v1106
      %v1298 = vpop.f32.mrf.mxu0
      %v1299 = vadd.f32 %v1276, %v1298
      %1300 = vdwg.mxu0
      %1301 = vmatpush.msra.mxu0 0.0
      %1302 = vmatpush.msra.mxu0 0.0
      %1303 = vmatpush.msra.mxu0 0.0
      %1304 = vmatpush.msra.mxu0 0.0
      %1305 = vmatpush.msra.mxu0 0.0
      %1306 = vmatpush.msra.mxu0 0.0
      %1307 = vmatpush.msra.mxu0 0.0
      %1308 = vmatpush.msra.mxu0 0.0
      %1309 = vmatpush.msra.mxu0 0.0
      %1310 = vmatpush.msra.mxu0 0.0
      %1311 = vmatpush.msra.mxu0 0.0
      %1312 = vmatpush.msra.mxu0 0.0
      %1313 = vmatpush.msra.mxu0 %v1083
      %1314 = vmatpush.msra.mxu0 %v1080
      %1315 = vmatpush.msra.mxu0 %v1077
      %1316 = vmatpush.msra.mxu0 %v1074
      %1317 = vmatmul.f32.gmra.mxu0 %v1113
      %v1318 = vpop.f32.mrf.mxu0
      %v1319 = vadd.f32 %v1296, %v1318
      %1320 = vmatmul.f32.gmra.mxu0 %v1115
      %v1321 = vpop.f32.mrf.mxu0
      %v1322 = vadd.f32 %v1299, %v1321
      %1323 = vdwg.mxu0
      %v1325 = vsel %vm849, %v857, 0
      %v1327 = vsel %vm849, %v860, 0
      %1329 = vmatpush.msra.mxu0 %v906
      %1330 = vmatpush.msra.mxu0 %v903
      %1331 = vmatpush.msra.mxu0 %v900
      %1332 = vmatpush.msra.mxu0 %v897
      %1333 = vmatpush.msra.mxu0 %v894
      %1334 = vmatpush.msra.mxu0 %v891
      %1335 = vmatpush.msra.mxu0 %v888
      %1336 = vmatpush.msra.mxu0 %v885
      %1337 = vmatpush.msra.mxu0 %v882
      %1338 = vmatpush.msra.mxu0 %v879
      %1339 = vmatpush.msra.mxu0 %v876
      %1340 = vmatpush.msra.mxu0 %v873
      %1341 = vmatpush.msra.mxu0 %v870
      %1342 = vmatpush.msra.mxu0 %v867
      %1343 = vmatpush.msra.mxu0 %v864
      %1344 = vmatpush.msra.mxu0 %v861
      %1345 = vmatmul.f32.gmra.mxu0 %v855
      %v1346 = vpop.f32.mrf.mxu0
      %v1347 = vadd.f32 %v1181, %v1346
      %1348 = vmatmul.f32.gmra.mxu0 %v858
      %v1349 = vpop.f32.mrf.mxu0
      %v1350 = vadd.f32 %v1184, %v1349
      %1351 = vdwg.mxu0
      %1352 = vmatpush.msra.mxu0 %v954
      %1353 = vmatpush.msra.mxu0 %v951
      %1354 = vmatpush.msra.mxu0 %v948
      %1355 = vmatpush.msra.mxu0 %v945
      %1356 = vmatpush.msra.mxu0 %v942
      %1357 = vmatpush.msra.mxu0 %v939
      %1358 = vmatpush.msra.mxu0 %v936
      %1359 = vmatpush.msra.mxu0 %v933
      %1360 = vmatpush.msra.mxu0 %v930
      %1361 = vmatpush.msra.mxu0 %v927
      %1362 = vmatpush.msra.mxu0 %v924
      %1363 = vmatpush.msra.mxu0 %v921
      %1364 = vmatpush.msra.mxu0 %v918
      %1365 = vmatpush.msra.mxu0 %v915
      %1366 = vmatpush.msra.mxu0 %v912
      %1367 = vmatpush.msra.mxu0 %v909
      %1368 = vmatmul.f32.gmra.mxu0 %v856
      %v1369 = vpop.f32.mrf.mxu0
      %v1370 = vadd.f32 %v1347, %v1369
      %1371 = vmatmul.f32.gmra.mxu0 %v859
      %v1372 = vpop.f32.mrf.mxu0
      %v1373 = vadd.f32 %v1350, %v1372
      %1374 = vdwg.mxu0
      %1375 = vmatpush.msra.mxu0 0.0
      %1376 = vmatpush.msra.mxu0 0.0
      %1377 = vmatpush.msra.mxu0 0.0
      %1378 = vmatpush.msra.mxu0 0.0
      %1379 = vmatpush.msra.mxu0 0.0
      %1380 = vmatpush.msra.mxu0 0.0
      %1381 = vmatpush.msra.mxu0 0.0
      %1382 = vmatpush.msra.mxu0 0.0
      %1383 = vmatpush.msra.mxu0 0.0
      %1384 = vmatpush.msra.mxu0 0.0
      %1385 = vmatpush.msra.mxu0 0.0
      %1386 = vmatpush.msra.mxu0 0.0
      %1387 = vmatpush.msra.mxu0 %v966
      %1388 = vmatpush.msra.mxu0 %v963
      %1389 = vmatpush.msra.mxu0 %v960
      %1390 = vmatpush.msra.mxu0 %v957
      %1391 = vmatmul.f32.gmra.mxu0 %v1325
      %v1392 = vpop.f32.mrf.mxu0
      %v1393 = vadd.f32 %v1370, %v1392
      %1394 = vmatmul.f32.gmra.mxu0 %v1327
      %v1395 = vpop.f32.mrf.mxu0
      %v1396 = vadd.f32 %v1373, %v1395
      %1397 = vdwg.mxu0
      %1398 = vmatpush.msra.mxu0 %v907
      %1399 = vmatpush.msra.mxu0 %v904
      %1400 = vmatpush.msra.mxu0 %v901
      %1401 = vmatpush.msra.mxu0 %v898
      %1402 = vmatpush.msra.mxu0 %v895
      %1403 = vmatpush.msra.mxu0 %v892
      %1404 = vmatpush.msra.mxu0 %v889
      %1405 = vmatpush.msra.mxu0 %v886
      %1406 = vmatpush.msra.mxu0 %v883
      %1407 = vmatpush.msra.mxu0 %v880
      %1408 = vmatpush.msra.mxu0 %v877
      %1409 = vmatpush.msra.mxu0 %v874
      %1410 = vmatpush.msra.mxu0 %v871
      %1411 = vmatpush.msra.mxu0 %v868
      %1412 = vmatpush.msra.mxu0 %v865
      %1413 = vmatpush.msra.mxu0 %v862
      %1414 = vmatmul.f32.gmra.mxu0 %v855
      %v1415 = vpop.f32.mrf.mxu0
      %v1416 = vadd.f32 %v1250, %v1415
      %1417 = vmatmul.f32.gmra.mxu0 %v858
      %v1418 = vpop.f32.mrf.mxu0
      %v1419 = vadd.f32 %v1253, %v1418
      %1420 = vdwg.mxu0
      %1421 = vmatpush.msra.mxu0 %v955
      %1422 = vmatpush.msra.mxu0 %v952
      %1423 = vmatpush.msra.mxu0 %v949
      %1424 = vmatpush.msra.mxu0 %v946
      %1425 = vmatpush.msra.mxu0 %v943
      %1426 = vmatpush.msra.mxu0 %v940
      %1427 = vmatpush.msra.mxu0 %v937
      %1428 = vmatpush.msra.mxu0 %v934
      %1429 = vmatpush.msra.mxu0 %v931
      %1430 = vmatpush.msra.mxu0 %v928
      %1431 = vmatpush.msra.mxu0 %v925
      %1432 = vmatpush.msra.mxu0 %v922
      %1433 = vmatpush.msra.mxu0 %v919
      %1434 = vmatpush.msra.mxu0 %v916
      %1435 = vmatpush.msra.mxu0 %v913
      %1436 = vmatpush.msra.mxu0 %v910
      %1437 = vmatmul.f32.gmra.mxu0 %v856
      %v1438 = vpop.f32.mrf.mxu0
      %v1439 = vadd.f32 %v1416, %v1438
      %1440 = vmatmul.f32.gmra.mxu0 %v859
      %v1441 = vpop.f32.mrf.mxu0
      %v1442 = vadd.f32 %v1419, %v1441
      %1443 = vdwg.mxu0
      %1444 = vmatpush.msra.mxu0 0.0
      %1445 = vmatpush.msra.mxu0 0.0
      %1446 = vmatpush.msra.mxu0 0.0
      %1447 = vmatpush.msra.mxu0 0.0
      %1448 = vmatpush.msra.mxu0 0.0
      %1449 = vmatpush.msra.mxu0 0.0
      %1450 = vmatpush.msra.mxu0 0.0
      %1451 = vmatpush.msra.mxu0 0.0
      %1452 = vmatpush.msra.mxu0 0.0
      %1453 = vmatpush.msra.mxu0 0.0
      %1454 = vmatpush.msra.mxu0 0.0
      %1455 = vmatpush.msra.mxu0 0.0
      %1456 = vmatpush.msra.mxu0 %v967
      %1457 = vmatpush.msra.mxu0 %v964
      %1458 = vmatpush.msra.mxu0 %v961
      %1459 = vmatpush.msra.mxu0 %v958
      %1460 = vmatmul.f32.gmra.mxu0 %v1325
      %v1461 = vpop.f32.mrf.mxu0
      %v1462 = vadd.f32 %v1439, %v1461
      %1463 = vmatmul.f32.gmra.mxu0 %v1327
      %v1464 = vpop.f32.mrf.mxu0
      %v1465 = vadd.f32 %v1442, %v1464
      %1466 = vdwg.mxu0
      %1467 = vmatpush.msra.mxu0 %v908
      %1468 = vmatpush.msra.mxu0 %v905
      %1469 = vmatpush.msra.mxu0 %v902
      %1470 = vmatpush.msra.mxu0 %v899
      %1471 = vmatpush.msra.mxu0 %v896
      %1472 = vmatpush.msra.mxu0 %v893
      %1473 = vmatpush.msra.mxu0 %v890
      %1474 = vmatpush.msra.mxu0 %v887
      %1475 = vmatpush.msra.mxu0 %v884
      %1476 = vmatpush.msra.mxu0 %v881
      %1477 = vmatpush.msra.mxu0 %v878
      %1478 = vmatpush.msra.mxu0 %v875
      %1479 = vmatpush.msra.mxu0 %v872
      %1480 = vmatpush.msra.mxu0 %v869
      %1481 = vmatpush.msra.mxu0 %v866
      %1482 = vmatpush.msra.mxu0 %v863
      %1483 = vmatmul.f32.gmra.mxu0 %v855
      %v1484 = vpop.f32.mrf.mxu0
      %v1485 = vadd.f32 %v1319, %v1484
      %1486 = vmatmul.f32.gmra.mxu0 %v858
      %v1487 = vpop.f32.mrf.mxu0
      %v1488 = vadd.f32 %v1322, %v1487
      %1489 = vdwg.mxu0
      %1490 = vmatpush.msra.mxu0 %v956
      %1491 = vmatpush.msra.mxu0 %v953
      %1492 = vmatpush.msra.mxu0 %v950
      %1493 = vmatpush.msra.mxu0 %v947
      %1494 = vmatpush.msra.mxu0 %v944
      %1495 = vmatpush.msra.mxu0 %v941
      %1496 = vmatpush.msra.mxu0 %v938
      %1497 = vmatpush.msra.mxu0 %v935
      %1498 = vmatpush.msra.mxu0 %v932
      %1499 = vmatpush.msra.mxu0 %v929
      %1500 = vmatpush.msra.mxu0 %v926
      %1501 = vmatpush.msra.mxu0 %v923
      %1502 = vmatpush.msra.mxu0 %v920
      %1503 = vmatpush.msra.mxu0 %v917
      %1504 = vmatpush.msra.mxu0 %v914
      %1505 = vmatpush.msra.mxu0 %v911
      %1506 = vmatmul.f32.gmra.mxu0 %v856
      %v1507 = vpop.f32.mrf.mxu0
      %v1508 = vadd.f32 %v1485, %v1507
      %1509 = vmatmul.f32.gmra.mxu0 %v859
      %v1510 = vpop.f32.mrf.mxu0
      %v1511 = vadd.f32 %v1488, %v1510
      %1512 = vdwg.mxu0
      %1513 = vmatpush.msra.mxu0 0.0
      %1514 = vmatpush.msra.mxu0 0.0
      %1515 = vmatpush.msra.mxu0 0.0
      %1516 = vmatpush.msra.mxu0 0.0
      %1517 = vmatpush.msra.mxu0 0.0
      %1518 = vmatpush.msra.mxu0 0.0
      %1519 = vmatpush.msra.mxu0 0.0
      %1520 = vmatpush.msra.mxu0 0.0
      %1521 = vmatpush.msra.mxu0 0.0
      %1522 = vmatpush.msra.mxu0 0.0
      %1523 = vmatpush.msra.mxu0 0.0
      %1524 = vmatpush.msra.mxu0 0.0
      %1525 = vmatpush.msra.mxu0 %v968
      %1526 = vmatpush.msra.mxu0 %v965
      %1527 = vmatpush.msra.mxu0 %v962
      %1528 = vmatpush.msra.mxu0 %v959
      %1529 = vmatmul.f32.gmra.mxu0 %v1325
      %v1530 = vpop.f32.mrf.mxu0
      %v1531 = vadd.f32 %v1508, %v1530
      %1532 = vmatmul.f32.gmra.mxu0 %v1327
      %v1533 = vpop.f32.mrf.mxu0
      %v1534 = vadd.f32 %v1511, %v1533
      %1535 = vdwg.mxu0
      %v1536 = vld [vmem:[#allocation2] sm:$0xfc]
      %v1537 = vld [vmem:[#allocation2 + $0x8] sm:$0xfc]
      %v1538 = vld [vmem:[#allocation2 + $0x10] sm:$0xfc]
      %v1539 = vld [vmem:[#allocation2 + $0x30] sm:$0x3]
      %v1540 = vld [vmem:[#allocation2 + $0x38] sm:$0x3]
      %v1541 = vld [vmem:[#allocation2 + $0x40] sm:$0x3]
      %s1542 = scalar_lea.vmem %s3, 1728
      %v1543 = vld [vmem:[%s1542] sm:$0xff]
      %v1544 = vld [vmem:[%s1542 + $0x8] sm:$0xff]
      %v1545 = vld [vmem:[%s1542 + $0x10] sm:$0xff]
      %v1546 = vld [vmem:[%s1542 + $0x18] sm:$0xff]
      %v1547 = vld [vmem:[%s1542 + $0x20] sm:$0xff]
      %v1548 = vld [vmem:[%s1542 + $0x28] sm:$0xff]
      %v1549 = vld [vmem:[%s1542 + $0x30] sm:$0xff]
      %v1550 = vld [vmem:[%s1542 + $0x38] sm:$0xff]
      %v1551 = vld [vmem:[%s1542 + $0x40] sm:$0xff]
      %v1552 = vld [vmem:[%s1542 + $0x48] sm:$0xff]
      %v1553 = vld [vmem:[%s1542 + $0x50] sm:$0xff]
      %v1554 = vld [vmem:[%s1542 + $0x58] sm:$0xff]
      %v1555 = vld [vmem:[%s1542 + $0x60] sm:$0xff]
      %v1556 = vld [vmem:[%s1542 + $0x68] sm:$0xff]
      %v1557 = vld [vmem:[%s1542 + $0x70] sm:$0xff]
      %v1558 = vld [vmem:[%s1542 + $0x78] sm:$0xff]
      %v1559 = vld [vmem:[%s1542 + $0x80] sm:$0xff]
      %v1560 = vld [vmem:[%s1542 + $0x88] sm:$0xff]
      %v1561 = vld [vmem:[%s1542 + $0x90] sm:$0xff]
      %v1562 = vld [vmem:[%s1542 + $0x98] sm:$0xff]
      %v1563 = vld [vmem:[%s1542 + $0xa0] sm:$0xff]
      %v1564 = vld [vmem:[%s1542 + $0xa8] sm:$0xff]
      %v1565 = vld [vmem:[%s1542 + $0xb0] sm:$0xff]
      %v1566 = vld [vmem:[%s1542 + $0xb8] sm:$0xff]
      %v1567 = vld [vmem:[%s1542 + $0xc0] sm:$0xff]
      %v1568 = vld [vmem:[%s1542 + $0xc8] sm:$0xff]
      %v1569 = vld [vmem:[%s1542 + $0xd0] sm:$0xff]
      %v1570 = vld [vmem:[%s1542 + $0xd8] sm:$0xff]
      %v1571 = vld [vmem:[%s1542 + $0xe0] sm:$0xff]
      %v1572 = vld [vmem:[%s1542 + $0xe8] sm:$0xff]
      %v1573 = vld [vmem:[%s1542 + $0xf0] sm:$0xff]
      %v1574 = vld [vmem:[%s1542 + $0xf8] sm:$0xff]
      %v1575 = vld [vmem:[%s1542 + $0x100] sm:$0xff]
      %v1576 = vld [vmem:[%s1542 + $0x108] sm:$0xff]
      %v1577 = vld [vmem:[%s1542 + $0x110] sm:$0xff]
      %v1578 = vld [vmem:[%s1542 + $0x118] sm:$0xff]
      %v1579 = vld [vmem:[%s1542 + $0x120] sm:$0xff]
      %v1580 = vld [vmem:[%s1542 + $0x128] sm:$0xff]
      %v1581 = vld [vmem:[%s1542 + $0x130] sm:$0xff]
      %v1582 = vld [vmem:[%s1542 + $0x138] sm:$0xff]
      %v1583 = vld [vmem:[%s1542 + $0x140] sm:$0xff]
      %v1584 = vld [vmem:[%s1542 + $0x148] sm:$0xff]
      %v1585 = vld [vmem:[%s1542 + $0x150] sm:$0xff]
      %v1586 = vld [vmem:[%s1542 + $0x158] sm:$0xff]
      %v1587 = vld [vmem:[%s1542 + $0x160] sm:$0xff]
      %v1588 = vld [vmem:[%s1542 + $0x168] sm:$0xff]
      %v1589 = vld [vmem:[%s1542 + $0x170] sm:$0xff]
      %v1590 = vld [vmem:[%s1542 + $0x178] sm:$0xff]
      %v1591 = vld [vmem:[%s1542 + $0x180] sm:$0xff]
      %v1592 = vld [vmem:[%s1542 + $0x188] sm:$0xff]
      %v1593 = vld [vmem:[%s1542 + $0x190] sm:$0xff]
      %v1594 = vld [vmem:[%s1542 + $0x198] sm:$0xff]
      %v1595 = vld [vmem:[%s1542 + $0x1a0] sm:$0xff]
      %v1596 = vld [vmem:[%s1542 + $0x1a8] sm:$0xff]
      %v1597 = vld [vmem:[%s1542 + $0x1b0] sm:$0xff]
      %v1598 = vld [vmem:[%s1542 + $0x1b8] sm:$0xff]
      %v1599 = vld [vmem:[%s1542 + $0x1c0] sm:$0xff]
      %v1600 = vld [vmem:[%s1542 + $0x1c8] sm:$0xff]
      %v1601 = vld [vmem:[%s1542 + $0x1d0] sm:$0xff]
      %v1602 = vld [vmem:[%s1542 + $0x1d8] sm:$0xff]
      %v1603 = vld [vmem:[%s1542 + $0x1e0] sm:$0xff]
      %v1604 = vld [vmem:[%s1542 + $0x1e8] sm:$0xff]
      %v1605 = vld [vmem:[%s1542 + $0x1f0] sm:$0xff]
      %v1606 = vld [vmem:[%s1542 + $0x1f8] sm:$0xff]
      %v1607 = vld [vmem:[%s1542 + $0x200] sm:$0xff]
      %v1608 = vld [vmem:[%s1542 + $0x208] sm:$0xff]
      %v1609 = vld [vmem:[%s1542 + $0x210] sm:$0xff]
      %v1610 = vld [vmem:[%s1542 + $0x218] sm:$0xff]
      %v1611 = vld [vmem:[%s1542 + $0x220] sm:$0xff]
      %v1612 = vld [vmem:[%s1542 + $0x228] sm:$0xff]
      %v1613 = vld [vmem:[%s1542 + $0x230] sm:$0xff]
      %v1614 = vld [vmem:[%s1542 + $0x238] sm:$0xff]
      %v1615 = vld [vmem:[%s1542 + $0x240] sm:$0xff]
      %v1616 = vld [vmem:[%s1542 + $0x248] sm:$0xff]
      %v1617 = vld [vmem:[%s1542 + $0x250] sm:$0xff]
      %v1618 = vld [vmem:[%s1542 + $0x258] sm:$0xff]
      %v1619 = vld [vmem:[%s1542 + $0x260] sm:$0xff]
      %v1620 = vld [vmem:[%s1542 + $0x268] sm:$0xff]
      %v1621 = vld [vmem:[%s1542 + $0x270] sm:$0xff]
      %v1622 = vld [vmem:[%s1542 + $0x278] sm:$0xff]
      %v1623 = vld [vmem:[%s1542 + $0x280] sm:$0xff]
      %v1624 = vld [vmem:[%s1542 + $0x288] sm:$0xff]
      %v1625 = vld [vmem:[%s1542 + $0x290] sm:$0xff]
      %v1626 = vld [vmem:[%s1542 + $0x298] sm:$0xff]
      %v1627 = vld [vmem:[%s1542 + $0x2a0] sm:$0xff]
      %v1628 = vld [vmem:[%s1542 + $0x2a8] sm:$0xff]
      %v1629 = vld [vmem:[%s1542 + $0x2b0] sm:$0xff]
      %v1630 = vld [vmem:[%s1542 + $0x2b8] sm:$0xff]
      %v1631 = vld [vmem:[%s1542 + $0x2c0] sm:$0xff]
      %v1632 = vld [vmem:[%s1542 + $0x2c8] sm:$0xff]
      %v1633 = vld [vmem:[%s1542 + $0x2d0] sm:$0xff]
      %v1634 = vld [vmem:[%s1542 + $0x2d8] sm:$0xff]
      %v1635 = vld [vmem:[%s1542 + $0x2e0] sm:$0xff]
      %v1636 = vld [vmem:[%s1542 + $0x2e8] sm:$0xff]
      %v1637 = vld [vmem:[%s1542 + $0x2f0] sm:$0xff]
      %v1638 = vld [vmem:[%s1542 + $0x2f8] sm:$0xff]
      %v1639 = vld [vmem:[%s1542 + $0x300] sm:$0xff]
      %v1640 = vld [vmem:[%s1542 + $0x308] sm:$0xff]
      %v1641 = vld [vmem:[%s1542 + $0x310] sm:$0xff]
      %v1642 = vld [vmem:[%s1542 + $0x318] sm:$0xff]
      %v1643 = vld [vmem:[%s1542 + $0x320] sm:$0xff]
      %v1644 = vld [vmem:[%s1542 + $0x328] sm:$0xff]
      %v1645 = vld [vmem:[%s1542 + $0x330] sm:$0xff]
      %v1646 = vld [vmem:[%s1542 + $0x338] sm:$0xff]
      %v1647 = vld [vmem:[%s1542 + $0x340] sm:$0xff]
      %v1648 = vld [vmem:[%s1542 + $0x348] sm:$0xff]
      %v1649 = vld [vmem:[%s1542 + $0x350] sm:$0xff]
      %v1650 = vld [vmem:[%s1542 + $0x358] sm:$0xff]
      %vm1657 = vcmask 1045504
      %v1658 = vrot.slane %v1536, 2
      %v1659 = vrot.slane %v858, 2
      %v1660 = vsel %vm1657, %v1658, %v1659
      %v1661 = vrot.slane %v1537, 2
      %v1662 = vrot.slane %v859, 2
      %v1663 = vsel %vm1657, %v1661, %v1662
      %v1664 = vrot.slane %v1538, 2
      %v1665 = vrot.slane %v860, 2
      %v1666 = vsel %vm1657, %v1664, %v1665
      %v1667 = vrot.slane %v1539, 2
      %v1668 = vsel %vm1657, %v1659, %v1667
      %v1669 = vrot.slane %v1540, 2
      %v1670 = vsel %vm1657, %v1662, %v1669
      %v1671 = vrot.slane %v1541, 2
      %v1672 = vsel %vm1657, %v1665, %v1671
      %v1677 = vsel %vm849, %v1666, 0
      %v1679 = vsel %vm849, %v1672, 0
      %1681 = vmatpush.msra.mxu0 %v1588
      %1682 = vmatpush.msra.mxu0 %v1585
      %1683 = vmatpush.msra.mxu0 %v1582
      %1684 = vmatpush.msra.mxu0 %v1579
      %1685 = vmatpush.msra.mxu0 %v1576
      %1686 = vmatpush.msra.mxu0 %v1573
      %1687 = vmatpush.msra.mxu0 %v1570
      %1688 = vmatpush.msra.mxu0 %v1567
      %1689 = vmatpush.msra.mxu0 %v1564
      %1690 = vmatpush.msra.mxu0 %v1561
      %1691 = vmatpush.msra.mxu0 %v1558
      %1692 = vmatpush.msra.mxu0 %v1555
      %1693 = vmatpush.msra.mxu0 %v1552
      %1694 = vmatpush.msra.mxu0 %v1549
      %1695 = vmatpush.msra.mxu0 %v1546
      %1696 = vmatpush.msra.mxu0 %v1543
      %1697 = vmatmul.f32.gmra.mxu0 %v1660
      %v1698 = vpop.f32.mrf.mxu0
      %v1699 = vadd.f32 0.0, %v1698
      %1700 = vmatmul.f32.gmra.mxu0 %v1668
      %v1701 = vpop.f32.mrf.mxu0
      %v1702 = vadd.f32 0.0, %v1701
      %1703 = vdwg.mxu0
      %1704 = vmatpush.msra.mxu0 %v1636
      %1705 = vmatpush.msra.mxu0 %v1633
      %1706 = vmatpush.msra.mxu0 %v1630
      %1707 = vmatpush.msra.mxu0 %v1627
      %1708 = vmatpush.msra.mxu0 %v1624
      %1709 = vmatpush.msra.mxu0 %v1621
      %1710 = vmatpush.msra.mxu0 %v1618
      %1711 = vmatpush.msra.mxu0 %v1615
      %1712 = vmatpush.msra.mxu0 %v1612
      %1713 = vmatpush.msra.mxu0 %v1609
      %1714 = vmatpush.msra.mxu0 %v1606
      %1715 = vmatpush.msra.mxu0 %v1603
      %1716 = vmatpush.msra.mxu0 %v1600
      %1717 = vmatpush.msra.mxu0 %v1597
      %1718 = vmatpush.msra.mxu0 %v1594
      %1719 = vmatpush.msra.mxu0 %v1591
      %1720 = vmatmul.f32.gmra.mxu0 %v1663
      %v1721 = vpop.f32.mrf.mxu0
      %v1722 = vadd.f32 %v1699, %v1721
      %1723 = vmatmul.f32.gmra.mxu0 %v1670
      %v1724 = vpop.f32.mrf.mxu0
      %v1725 = vadd.f32 %v1702, %v1724
      %1726 = vdwg.mxu0
      %1727 = vmatpush.msra.mxu0 0.0
      %1728 = vmatpush.msra.mxu0 0.0
      %1729 = vmatpush.msra.mxu0 0.0
      %1730 = vmatpush.msra.mxu0 0.0
      %1731 = vmatpush.msra.mxu0 0.0
      %1732 = vmatpush.msra.mxu0 0.0
      %1733 = vmatpush.msra.mxu0 0.0
      %1734 = vmatpush.msra.mxu0 0.0
      %1735 = vmatpush.msra.mxu0 0.0
      %1736 = vmatpush.msra.mxu0 0.0
      %1737 = vmatpush.msra.mxu0 0.0
      %1738 = vmatpush.msra.mxu0 0.0
      %1739 = vmatpush.msra.mxu0 %v1648
      %1740 = vmatpush.msra.mxu0 %v1645
      %1741 = vmatpush.msra.mxu0 %v1642
      %1742 = vmatpush.msra.mxu0 %v1639
      %1743 = vmatmul.f32.gmra.mxu0 %v1677
      %v1744 = vpop.f32.mrf.mxu0
      %v1745 = vadd.f32 %v1722, %v1744
      %1746 = vmatmul.f32.gmra.mxu0 %v1679
      %v1747 = vpop.f32.mrf.mxu0
      %v1748 = vadd.f32 %v1725, %v1747
      %1749 = vdwg.mxu0
      %1750 = vmatpush.msra.mxu0 %v1589
      %1751 = vmatpush.msra.mxu0 %v1586
      %1752 = vmatpush.msra.mxu0 %v1583
      %1753 = vmatpush.msra.mxu0 %v1580
      %1754 = vmatpush.msra.mxu0 %v1577
      %1755 = vmatpush.msra.mxu0 %v1574
      %1756 = vmatpush.msra.mxu0 %v1571
      %1757 = vmatpush.msra.mxu0 %v1568
      %1758 = vmatpush.msra.mxu0 %v1565
      %1759 = vmatpush.msra.mxu0 %v1562
      %1760 = vmatpush.msra.mxu0 %v1559
      %1761 = vmatpush.msra.mxu0 %v1556
      %1762 = vmatpush.msra.mxu0 %v1553
      %1763 = vmatpush.msra.mxu0 %v1550
      %1764 = vmatpush.msra.mxu0 %v1547
      %1765 = vmatpush.msra.mxu0 %v1544
      %1766 = vmatmul.f32.gmra.mxu0 %v1660
      %v1767 = vpop.f32.mrf.mxu0
      %v1768 = vadd.f32 0.0, %v1767
      %1769 = vmatmul.f32.gmra.mxu0 %v1668
      %v1770 = vpop.f32.mrf.mxu0
      %v1771 = vadd.f32 0.0, %v1770
      %1772 = vdwg.mxu0
      %1773 = vmatpush.msra.mxu0 %v1637
      %1774 = vmatpush.msra.mxu0 %v1634
      %1775 = vmatpush.msra.mxu0 %v1631
      %1776 = vmatpush.msra.mxu0 %v1628
      %1777 = vmatpush.msra.mxu0 %v1625
      %1778 = vmatpush.msra.mxu0 %v1622
      %1779 = vmatpush.msra.mxu0 %v1619
      %1780 = vmatpush.msra.mxu0 %v1616
      %1781 = vmatpush.msra.mxu0 %v1613
      %1782 = vmatpush.msra.mxu0 %v1610
      %1783 = vmatpush.msra.mxu0 %v1607
      %1784 = vmatpush.msra.mxu0 %v1604
      %1785 = vmatpush.msra.mxu0 %v1601
      %1786 = vmatpush.msra.mxu0 %v1598
      %1787 = vmatpush.msra.mxu0 %v1595
      %1788 = vmatpush.msra.mxu0 %v1592
      %1789 = vmatmul.f32.gmra.mxu0 %v1663
      %v1790 = vpop.f32.mrf.mxu0
      %v1791 = vadd.f32 %v1768, %v1790
      %1792 = vmatmul.f32.gmra.mxu0 %v1670
      %v1793 = vpop.f32.mrf.mxu0
      %v1794 = vadd.f32 %v1771, %v1793
      %1795 = vdwg.mxu0
      %1796 = vmatpush.msra.mxu0 0.0
      %1797 = vmatpush.msra.mxu0 0.0
      %1798 = vmatpush.msra.mxu0 0.0
      %1799 = vmatpush.msra.mxu0 0.0
      %1800 = vmatpush.msra.mxu0 0.0
      %1801 = vmatpush.msra.mxu0 0.0
      %1802 = vmatpush.msra.mxu0 0.0
      %1803 = vmatpush.msra.mxu0 0.0
      %1804 = vmatpush.msra.mxu0 0.0
      %1805 = vmatpush.msra.mxu0 0.0
      %1806 = vmatpush.msra.mxu0 0.0
      %1807 = vmatpush.msra.mxu0 0.0
      %1808 = vmatpush.msra.mxu0 %v1649
      %1809 = vmatpush.msra.mxu0 %v1646
      %1810 = vmatpush.msra.mxu0 %v1643
      %1811 = vmatpush.msra.mxu0 %v1640
      %1812 = vmatmul.f32.gmra.mxu0 %v1677
      %v1813 = vpop.f32.mrf.mxu0
      %v1814 = vadd.f32 %v1791, %v1813
      %1815 = vmatmul.f32.gmra.mxu0 %v1679
      %v1816 = vpop.f32.mrf.mxu0
      %v1817 = vadd.f32 %v1794, %v1816
      %1818 = vdwg.mxu0
      %1819 = vmatpush.msra.mxu0 %v1590
      %1820 = vmatpush.msra.mxu0 %v1587
      %1821 = vmatpush.msra.mxu0 %v1584
      %1822 = vmatpush.msra.mxu0 %v1581
      %1823 = vmatpush.msra.mxu0 %v1578
      %1824 = vmatpush.msra.mxu0 %v1575
      %1825 = vmatpush.msra.mxu0 %v1572
      %1826 = vmatpush.msra.mxu0 %v1569
      %1827 = vmatpush.msra.mxu0 %v1566
      %1828 = vmatpush.msra.mxu0 %v1563
      %1829 = vmatpush.msra.mxu0 %v1560
      %1830 = vmatpush.msra.mxu0 %v1557
      %1831 = vmatpush.msra.mxu0 %v1554
      %1832 = vmatpush.msra.mxu0 %v1551
      %1833 = vmatpush.msra.mxu0 %v1548
      %1834 = vmatpush.msra.mxu0 %v1545
      %1835 = vmatmul.f32.gmra.mxu0 %v1660
      %v1836 = vpop.f32.mrf.mxu0
      %v1837 = vadd.f32 0.0, %v1836
      %1838 = vmatmul.f32.gmra.mxu0 %v1668
      %v1839 = vpop.f32.mrf.mxu0
      %v1840 = vadd.f32 0.0, %v1839
      %1841 = vdwg.mxu0
      %1842 = vmatpush.msra.mxu0 %v1638
      %1843 = vmatpush.msra.mxu0 %v1635
      %1844 = vmatpush.msra.mxu0 %v1632
      %1845 = vmatpush.msra.mxu0 %v1629
      %1846 = vmatpush.msra.mxu0 %v1626
      %1847 = vmatpush.msra.mxu0 %v1623
      %1848 = vmatpush.msra.mxu0 %v1620
      %1849 = vmatpush.msra.mxu0 %v1617
      %1850 = vmatpush.msra.mxu0 %v1614
      %1851 = vmatpush.msra.mxu0 %v1611
      %1852 = vmatpush.msra.mxu0 %v1608
      %1853 = vmatpush.msra.mxu0 %v1605
      %1854 = vmatpush.msra.mxu0 %v1602
      %1855 = vmatpush.msra.mxu0 %v1599
      %1856 = vmatpush.msra.mxu0 %v1596
      %1857 = vmatpush.msra.mxu0 %v1593
      %1858 = vmatmul.f32.gmra.mxu0 %v1663
      %v1859 = vpop.f32.mrf.mxu0
      %v1860 = vadd.f32 %v1837, %v1859
      %1861 = vmatmul.f32.gmra.mxu0 %v1670
      %v1862 = vpop.f32.mrf.mxu0
      %v1863 = vadd.f32 %v1840, %v1862
      %1864 = vdwg.mxu0
      %1865 = vmatpush.msra.mxu0 0.0
      %1866 = vmatpush.msra.mxu0 0.0
      %1867 = vmatpush.msra.mxu0 0.0
      %1868 = vmatpush.msra.mxu0 0.0
      %1869 = vmatpush.msra.mxu0 0.0
      %1870 = vmatpush.msra.mxu0 0.0
      %1871 = vmatpush.msra.mxu0 0.0
      %1872 = vmatpush.msra.mxu0 0.0
      %1873 = vmatpush.msra.mxu0 0.0
      %1874 = vmatpush.msra.mxu0 0.0
      %1875 = vmatpush.msra.mxu0 0.0
      %1876 = vmatpush.msra.mxu0 0.0
      %1877 = vmatpush.msra.mxu0 %v1650
      %1878 = vmatpush.msra.mxu0 %v1647
      %1879 = vmatpush.msra.mxu0 %v1644
      %1880 = vmatpush.msra.mxu0 %v1641
      %1881 = vmatmul.f32.gmra.mxu0 %v1677
      %v1882 = vpop.f32.mrf.mxu0
      %v1883 = vadd.f32 %v1860, %v1882
      %1884 = vmatmul.f32.gmra.mxu0 %v1679
      %v1885 = vpop.f32.mrf.mxu0
      %v1886 = vadd.f32 %v1863, %v1885
      %1887 = vdwg.mxu0
      %v1888 = vadd.f32 %v1393, %v1745
      %v1889 = vadd.f32 %v1462, %v1814
      %v1890 = vadd.f32 %v1531, %v1883
      %v1891 = vadd.f32 %v1396, %v1748
      %v1892 = vadd.f32 %v1465, %v1817
      %v1893 = vadd.f32 %v1534, %v1886
      %v1894 = vld [vmem:[%s4] sm:$0x7]
      %v1896 = vperm.slane %v1894, 0
      %v1897 = vperm.slane %v1894, 1
      %v1898 = vperm.slane %v1894, 2
      %v1902 = vadd.f32 %v1888, %v1896
      %v1903 = vadd.f32 %v1889, %v1897
      %v1904 = vadd.f32 %v1890, %v1898
      %v1905 = vadd.f32 %v1891, %v1896
      %v1906 = vadd.f32 %v1892, %v1897
      %v1907 = vadd.f32 %v1893, %v1898
      %v1908 = vmax.f32 %v1902, 0.0
      %v1909 = vmax.f32 %v1903, 0.0
      %v1910 = vmax.f32 %v1904, 0.0
      %v1911 = vmax.f32 %v1905, 0.0
      %v1912 = vmax.f32 %v1906, 0.0
      %v1913 = vmax.f32 %v1907, 0.0
      %1914 = vst [vmem:[%s313] sm:$0xff] %v1908
      %1915 = vst [vmem:[%s313 + $0x8] sm:$0xff] %v1909
      %1916 = vst.msk [vmem:[%s313 + $0x10] sm:$0xff] %vm849, %v1910
      %1917 = vst [vmem:[%s313 + $0x18] sm:$0xff] %v1911
      %1918 = vst [vmem:[%s313 + $0x20] sm:$0xff] %v1912
      %1919 = vst.msk [vmem:[%s313 + $0x28] sm:$0xff] %vm849, %v1913
      %1920 = vst.msk [vmem:[#allocation3] ss:$8 sm:$0x7] %vm812, 0.0
      %1921 = vst.msk [vmem:[#allocation3] ss:$8 sm:$0x0] %vm812, 0.0
      %s1922 = scalar_lea.vmem [#allocation3], 49
      %1923 = vst.msk [vmem:[%s1922] ss:$8 sm:$0x7] %vm812, 0.0
      %1924 = vst.msk [vmem:[%s1922] ss:$8 sm:$0x0] %vm812, 0.0
      %v1931 = vrot.slane %v1908, 7
      %v1932 = vrot.slane %v1909, 7
      %v1933 = vrot.slane %v1910, 7
      %v1934 = vrot.slane %v1911, 7
      %v1935 = vsel %vm824, %v1931, %v1934
      %v1936 = vrot.slane %v1912, 7
      %v1937 = vsel %vm824, %v1932, %v1936
      %v1938 = vrot.slane %v1913, 7
      %v1939 = vsel %vm824, %v1933, %v1938
      %1949 = vst [vmem:[#allocation3] sm:$0xfe] %v1931
      %1950 = vst [vmem:[#allocation3 + $0x8] sm:$0xfe] %v1932
      %1951 = vst.msk [vmem:[#allocation3 + $0x10] sm:$0xfe] %vm845, %v1933
      %1952 = vst [vmem:[#allocation3 + $0x18] sm:$0xff] %v1935
      %1953 = vst [vmem:[#allocation3 + $0x20] sm:$0xff] %v1937
      %1954 = vst.msk [vmem:[#allocation3 + $0x28] sm:$0xff] %vm849, %v1939
      %1955 = vst [vmem:[#allocation3 + $0x30] sm:$0x1] %v1934
      %1956 = vst [vmem:[#allocation3 + $0x38] sm:$0x1] %v1936
      %1957 = vst.msk [vmem:[#allocation3 + $0x40] sm:$0x1] %vm853, %v1938
      %v1958 = vld [vmem:[#allocation3] sm:$0xff]
      %v1959 = vld [vmem:[#allocation3 + $0x8] sm:$0xff]
      %v1960 = vld [vmem:[#allocation3 + $0x10] sm:$0xff]
      %v1961 = vld [vmem:[#allocation3 + $0x18] sm:$0xff]
      %v1962 = vld [vmem:[#allocation3 + $0x20] sm:$0xff]
      %v1963 = vld [vmem:[#allocation3 + $0x28] sm:$0xff]
      %v1964 = vld [vmem:[%s5] sm:$0xff]
      %v1965 = vld [vmem:[%s5 + $0x8] sm:$0xff]
      %v1966 = vld [vmem:[%s5 + $0x10] sm:$0xff]
      %v1967 = vld [vmem:[%s5 + $0x18] sm:$0xff]
      %v1968 = vld [vmem:[%s5 + $0x20] sm:$0xff]
      %v1969 = vld [vmem:[%s5 + $0x28] sm:$0xff]
      %v1970 = vld [vmem:[%s5 + $0x30] sm:$0xff]
      %v1971 = vld [vmem:[%s5 + $0x38] sm:$0xff]
      %v1972 = vld [vmem:[%s5 + $0x40] sm:$0xff]
      %v1973 = vld [vmem:[%s5 + $0x48] sm:$0xff]
      %v1974 = vld [vmem:[%s5 + $0x50] sm:$0xff]
      %v1975 = vld [vmem:[%s5 + $0x58] sm:$0xff]
      %v1976 = vld [vmem:[%s5 + $0x60] sm:$0xff]
      %v1977 = vld [vmem:[%s5 + $0x68] sm:$0xff]
      %v1978 = vld [vmem:[%s5 + $0x70] sm:$0xff]
      %v1979 = vld [vmem:[%s5 + $0x78] sm:$0xff]
      %v1980 = vld [vmem:[%s5 + $0x80] sm:$0xff]
      %v1981 = vld [vmem:[%s5 + $0x88] sm:$0xff]
      %v1982 = vld [vmem:[%s5 + $0x90] sm:$0xff]
      %v1983 = vld [vmem:[%s5 + $0x98] sm:$0xff]
      %v1984 = vld [vmem:[%s5 + $0xa0] sm:$0xff]
      %v1985 = vld [vmem:[%s5 + $0xa8] sm:$0xff]
      %v1986 = vld [vmem:[%s5 + $0xb0] sm:$0xff]
      %v1987 = vld [vmem:[%s5 + $0xb8] sm:$0xff]
      %v1988 = vld [vmem:[%s5 + $0xc0] sm:$0xff]
      %v1989 = vld [vmem:[%s5 + $0xc8] sm:$0xff]
      %v1990 = vld [vmem:[%s5 + $0xd0] sm:$0xff]
      %v1991 = vld [vmem:[%s5 + $0xd8] sm:$0xff]
      %v1992 = vld [vmem:[%s5 + $0xe0] sm:$0xff]
      %v1993 = vld [vmem:[%s5 + $0xe8] sm:$0xff]
      %v1994 = vld [vmem:[%s5 + $0xf0] sm:$0xff]
      %v1995 = vld [vmem:[%s5 + $0xf8] sm:$0xff]
      %v1996 = vld [vmem:[%s5 + $0x100] sm:$0xff]
      %v1997 = vld [vmem:[%s5 + $0x108] sm:$0xff]
      %v1998 = vld [vmem:[%s5 + $0x110] sm:$0xff]
      %v1999 = vld [vmem:[%s5 + $0x118] sm:$0xff]
      %v2000 = vld [vmem:[#allocation3] sm:$0xfe]
      %v2001 = vld [vmem:[#allocation3 + $0x8] sm:$0xfe]
      %v2002 = vld [vmem:[#allocation3 + $0x10] sm:$0xfe]
      %v2003 = vld [vmem:[#allocation3 + $0x30] sm:$0x1]
      %v2004 = vld [vmem:[#allocation3 + $0x38] sm:$0x1]
      %v2005 = vld [vmem:[#allocation3 + $0x40] sm:$0x1]
      %s2006 = scalar_lea.vmem %s5, 288
      %v2007 = vld [vmem:[%s2006] sm:$0xff]
      %v2008 = vld [vmem:[%s2006 + $0x8] sm:$0xff]
      %v2009 = vld [vmem:[%s2006 + $0x10] sm:$0xff]
      %v2010 = vld [vmem:[%s2006 + $0x18] sm:$0xff]
      %v2011 = vld [vmem:[%s2006 + $0x20] sm:$0xff]
      %v2012 = vld [vmem:[%s2006 + $0x28] sm:$0xff]
      %v2013 = vld [vmem:[%s2006 + $0x30] sm:$0xff]
      %v2014 = vld [vmem:[%s2006 + $0x38] sm:$0xff]
      %v2015 = vld [vmem:[%s2006 + $0x40] sm:$0xff]
      %v2016 = vld [vmem:[%s2006 + $0x48] sm:$0xff]
      %v2017 = vld [vmem:[%s2006 + $0x50] sm:$0xff]
      %v2018 = vld [vmem:[%s2006 + $0x58] sm:$0xff]
      %v2019 = vld [vmem:[%s2006 + $0x60] sm:$0xff]
      %v2020 = vld [vmem:[%s2006 + $0x68] sm:$0xff]
      %v2021 = vld [vmem:[%s2006 + $0x70] sm:$0xff]
      %v2022 = vld [vmem:[%s2006 + $0x78] sm:$0xff]
      %v2023 = vld [vmem:[%s2006 + $0x80] sm:$0xff]
      %v2024 = vld [vmem:[%s2006 + $0x88] sm:$0xff]
      %v2025 = vld [vmem:[%s2006 + $0x90] sm:$0xff]
      %v2026 = vld [vmem:[%s2006 + $0x98] sm:$0xff]
      %v2027 = vld [vmem:[%s2006 + $0xa0] sm:$0xff]
      %v2028 = vld [vmem:[%s2006 + $0xa8] sm:$0xff]
      %v2029 = vld [vmem:[%s2006 + $0xb0] sm:$0xff]
      %v2030 = vld [vmem:[%s2006 + $0xb8] sm:$0xff]
      %v2031 = vld [vmem:[%s2006 + $0xc0] sm:$0xff]
      %v2032 = vld [vmem:[%s2006 + $0xc8] sm:$0xff]
      %v2033 = vld [vmem:[%s2006 + $0xd0] sm:$0xff]
      %v2034 = vld [vmem:[%s2006 + $0xd8] sm:$0xff]
      %v2035 = vld [vmem:[%s2006 + $0xe0] sm:$0xff]
      %v2036 = vld [vmem:[%s2006 + $0xe8] sm:$0xff]
      %v2037 = vld [vmem:[%s2006 + $0xf0] sm:$0xff]
      %v2038 = vld [vmem:[%s2006 + $0xf8] sm:$0xff]
      %v2039 = vld [vmem:[%s2006 + $0x100] sm:$0xff]
      %v2040 = vld [vmem:[%s2006 + $0x108] sm:$0xff]
      %v2041 = vld [vmem:[%s2006 + $0x110] sm:$0xff]
      %v2042 = vld [vmem:[%s2006 + $0x118] sm:$0xff]
      %v2052 = vrot.slane %v2000, 1
      %v2053 = vrot.slane %v1961, 1
      %v2054 = vsel %vm1093, %v2052, %v2053
      %v2055 = vrot.slane %v2001, 1
      %v2056 = vrot.slane %v1962, 1
      %v2057 = vsel %vm1093, %v2055, %v2056
      %v2058 = vrot.slane %v2002, 1
      %v2059 = vrot.slane %v1963, 1
      %v2060 = vsel %vm1093, %v2058, %v2059
      %v2061 = vrot.slane %v2003, 1
      %v2062 = vsel %vm1093, %v2053, %v2061
      %v2063 = vrot.slane %v2004, 1
      %v2064 = vsel %vm1093, %v2056, %v2063
      %v2065 = vrot.slane %v2005, 1
      %v2066 = vsel %vm1093, %v2059, %v2065
      %v2071 = vsel %vm849, %v2060, 0
      %v2073 = vsel %vm849, %v2066, 0
      %2075 = vmatpush.msra.mxu0 %v2022
      %2076 = vmatpush.msra.mxu0 %v2021
      %2077 = vmatpush.msra.mxu0 %v2020
      %2078 = vmatpush.msra.mxu0 %v2019
      %2079 = vmatpush.msra.mxu0 %v2018
      %2080 = vmatpush.msra.mxu0 %v2017
      %2081 = vmatpush.msra.mxu0 %v2016
      %2082 = vmatpush.msra.mxu0 %v2015
      %2083 = vmatpush.msra.mxu0 %v2014
      %2084 = vmatpush.msra.mxu0 %v2013
      %2085 = vmatpush.msra.mxu0 %v2012
      %2086 = vmatpush.msra.mxu0 %v2011
      %2087 = vmatpush.msra.mxu0 %v2010
      %2088 = vmatpush.msra.mxu0 %v2009
      %2089 = vmatpush.msra.mxu0 %v2008
      %2090 = vmatpush.msra.mxu0 %v2007
      %2091 = vmatmul.f32.gmra.mxu0 %v2054
      %v2092 = vpop.f32.mrf.mxu0
      %v2093 = vadd.f32 0.0, %v2092
      %2094 = vmatmul.f32.gmra.mxu0 %v2062
      %v2095 = vpop.f32.mrf.mxu0
      %v2096 = vadd.f32 0.0, %v2095
      %2097 = vdwg.mxu0
      %2098 = vmatpush.msra.mxu0 %v2038
      %2099 = vmatpush.msra.mxu0 %v2037
      %2100 = vmatpush.msra.mxu0 %v2036
      %2101 = vmatpush.msra.mxu0 %v2035
      %2102 = vmatpush.msra.mxu0 %v2034
      %2103 = vmatpush.msra.mxu0 %v2033
      %2104 = vmatpush.msra.mxu0 %v2032
      %2105 = vmatpush.msra.mxu0 %v2031
      %2106 = vmatpush.msra.mxu0 %v2030
      %2107 = vmatpush.msra.mxu0 %v2029
      %2108 = vmatpush.msra.mxu0 %v2028
      %2109 = vmatpush.msra.mxu0 %v2027
      %2110 = vmatpush.msra.mxu0 %v2026
      %2111 = vmatpush.msra.mxu0 %v2025
      %2112 = vmatpush.msra.mxu0 %v2024
      %2113 = vmatpush.msra.mxu0 %v2023
      %2114 = vmatmul.f32.gmra.mxu0 %v2057
      %v2115 = vpop.f32.mrf.mxu0
      %v2116 = vadd.f32 %v2093, %v2115
      %2117 = vmatmul.f32.gmra.mxu0 %v2064
      %v2118 = vpop.f32.mrf.mxu0
      %v2119 = vadd.f32 %v2096, %v2118
      %2120 = vdwg.mxu0
      %2121 = vmatpush.msra.mxu0 0.0
      %2122 = vmatpush.msra.mxu0 0.0
      %2123 = vmatpush.msra.mxu0 0.0
      %2124 = vmatpush.msra.mxu0 0.0
      %2125 = vmatpush.msra.mxu0 0.0
      %2126 = vmatpush.msra.mxu0 0.0
      %2127 = vmatpush.msra.mxu0 0.0
      %2128 = vmatpush.msra.mxu0 0.0
      %2129 = vmatpush.msra.mxu0 0.0
      %2130 = vmatpush.msra.mxu0 0.0
      %2131 = vmatpush.msra.mxu0 0.0
      %2132 = vmatpush.msra.mxu0 0.0
      %2133 = vmatpush.msra.mxu0 %v2042
      %2134 = vmatpush.msra.mxu0 %v2041
      %2135 = vmatpush.msra.mxu0 %v2040
      %2136 = vmatpush.msra.mxu0 %v2039
      %2137 = vmatmul.f32.gmra.mxu0 %v2071
      %v2138 = vpop.f32.mrf.mxu0
      %v2139 = vadd.f32 %v2116, %v2138
      %2140 = vmatmul.f32.gmra.mxu0 %v2073
      %v2141 = vpop.f32.mrf.mxu0
      %v2142 = vadd.f32 %v2119, %v2141
      %2143 = vdwg.mxu0
      %v2145 = vsel %vm849, %v1960, 0
      %v2147 = vsel %vm849, %v1963, 0
      %2149 = vmatpush.msra.mxu0 %v1979
      %2150 = vmatpush.msra.mxu0 %v1978
      %2151 = vmatpush.msra.mxu0 %v1977
      %2152 = vmatpush.msra.mxu0 %v1976
      %2153 = vmatpush.msra.mxu0 %v1975
      %2154 = vmatpush.msra.mxu0 %v1974
      %2155 = vmatpush.msra.mxu0 %v1973
      %2156 = vmatpush.msra.mxu0 %v1972
      %2157 = vmatpush.msra.mxu0 %v1971
      %2158 = vmatpush.msra.mxu0 %v1970
      %2159 = vmatpush.msra.mxu0 %v1969
      %2160 = vmatpush.msra.mxu0 %v1968
      %2161 = vmatpush.msra.mxu0 %v1967
      %2162 = vmatpush.msra.mxu0 %v1966
      %2163 = vmatpush.msra.mxu0 %v1965
      %2164 = vmatpush.msra.mxu0 %v1964
      %2165 = vmatmul.f32.gmra.mxu0 %v1958
      %v2166 = vpop.f32.mrf.mxu0
      %v2167 = vadd.f32 %v2139, %v2166
      %2168 = vmatmul.f32.gmra.mxu0 %v1961
      %v2169 = vpop.f32.mrf.mxu0
      %v2170 = vadd.f32 %v2142, %v2169
      %2171 = vdwg.mxu0
      %2172 = vmatpush.msra.mxu0 %v1995
      %2173 = vmatpush.msra.mxu0 %v1994
      %2174 = vmatpush.msra.mxu0 %v1993
      %2175 = vmatpush.msra.mxu0 %v1992
      %2176 = vmatpush.msra.mxu0 %v1991
      %2177 = vmatpush.msra.mxu0 %v1990
      %2178 = vmatpush.msra.mxu0 %v1989
      %2179 = vmatpush.msra.mxu0 %v1988
      %2180 = vmatpush.msra.mxu0 %v1987
      %2181 = vmatpush.msra.mxu0 %v1986
      %2182 = vmatpush.msra.mxu0 %v1985
      %2183 = vmatpush.msra.mxu0 %v1984
      %2184 = vmatpush.msra.mxu0 %v1983
      %2185 = vmatpush.msra.mxu0 %v1982
      %2186 = vmatpush.msra.mxu0 %v1981
      %2187 = vmatpush.msra.mxu0 %v1980
      %2188 = vmatmul.f32.gmra.mxu0 %v1959
      %v2189 = vpop.f32.mrf.mxu0
      %v2190 = vadd.f32 %v2167, %v2189
      %2191 = vmatmul.f32.gmra.mxu0 %v1962
      %v2192 = vpop.f32.mrf.mxu0
      %v2193 = vadd.f32 %v2170, %v2192
      %2194 = vdwg.mxu0
      %2195 = vmatpush.msra.mxu0 0.0
      %2196 = vmatpush.msra.mxu0 0.0
      %2197 = vmatpush.msra.mxu0 0.0
      %2198 = vmatpush.msra.mxu0 0.0
      %2199 = vmatpush.msra.mxu0 0.0
      %2200 = vmatpush.msra.mxu0 0.0
      %2201 = vmatpush.msra.mxu0 0.0
      %2202 = vmatpush.msra.mxu0 0.0
      %2203 = vmatpush.msra.mxu0 0.0
      %2204 = vmatpush.msra.mxu0 0.0
      %2205 = vmatpush.msra.mxu0 0.0
      %2206 = vmatpush.msra.mxu0 0.0
      %2207 = vmatpush.msra.mxu0 %v1999
      %2208 = vmatpush.msra.mxu0 %v1998
      %2209 = vmatpush.msra.mxu0 %v1997
      %2210 = vmatpush.msra.mxu0 %v1996
      %2211 = vmatmul.f32.gmra.mxu0 %v2145
      %v2212 = vpop.f32.mrf.mxu0
      %v2213 = vadd.f32 %v2190, %v2212
      %2214 = vmatmul.f32.gmra.mxu0 %v2147
      %v2215 = vpop.f32.mrf.mxu0
      %v2216 = vadd.f32 %v2193, %v2215
      %2217 = vdwg.mxu0
      %v2218 = vld [vmem:[#allocation3] sm:$0xfc]
      %v2219 = vld [vmem:[#allocation3 + $0x8] sm:$0xfc]
      %v2220 = vld [vmem:[#allocation3 + $0x10] sm:$0xfc]
      %v2221 = vld [vmem:[#allocation3 + $0x30] sm:$0x3]
      %v2222 = vld [vmem:[#allocation3 + $0x38] sm:$0x3]
      %v2223 = vld [vmem:[#allocation3 + $0x40] sm:$0x3]
      %s2224 = scalar_lea.vmem %s5, 576
      %v2225 = vld [vmem:[%s2224] sm:$0xff]
      %v2226 = vld [vmem:[%s2224 + $0x8] sm:$0xff]
      %v2227 = vld [vmem:[%s2224 + $0x10] sm:$0xff]
      %v2228 = vld [vmem:[%s2224 + $0x18] sm:$0xff]
      %v2229 = vld [vmem:[%s2224 + $0x20] sm:$0xff]
      %v2230 = vld [vmem:[%s2224 + $0x28] sm:$0xff]
      %v2231 = vld [vmem:[%s2224 + $0x30] sm:$0xff]
      %v2232 = vld [vmem:[%s2224 + $0x38] sm:$0xff]
      %v2233 = vld [vmem:[%s2224 + $0x40] sm:$0xff]
      %v2234 = vld [vmem:[%s2224 + $0x48] sm:$0xff]
      %v2235 = vld [vmem:[%s2224 + $0x50] sm:$0xff]
      %v2236 = vld [vmem:[%s2224 + $0x58] sm:$0xff]
      %v2237 = vld [vmem:[%s2224 + $0x60] sm:$0xff]
      %v2238 = vld [vmem:[%s2224 + $0x68] sm:$0xff]
      %v2239 = vld [vmem:[%s2224 + $0x70] sm:$0xff]
      %v2240 = vld [vmem:[%s2224 + $0x78] sm:$0xff]
      %v2241 = vld [vmem:[%s2224 + $0x80] sm:$0xff]
      %v2242 = vld [vmem:[%s2224 + $0x88] sm:$0xff]
      %v2243 = vld [vmem:[%s2224 + $0x90] sm:$0xff]
      %v2244 = vld [vmem:[%s2224 + $0x98] sm:$0xff]
      %v2245 = vld [vmem:[%s2224 + $0xa0] sm:$0xff]
      %v2246 = vld [vmem:[%s2224 + $0xa8] sm:$0xff]
      %v2247 = vld [vmem:[%s2224 + $0xb0] sm:$0xff]
      %v2248 = vld [vmem:[%s2224 + $0xb8] sm:$0xff]
      %v2249 = vld [vmem:[%s2224 + $0xc0] sm:$0xff]
      %v2250 = vld [vmem:[%s2224 + $0xc8] sm:$0xff]
      %v2251 = vld [vmem:[%s2224 + $0xd0] sm:$0xff]
      %v2252 = vld [vmem:[%s2224 + $0xd8] sm:$0xff]
      %v2253 = vld [vmem:[%s2224 + $0xe0] sm:$0xff]
      %v2254 = vld [vmem:[%s2224 + $0xe8] sm:$0xff]
      %v2255 = vld [vmem:[%s2224 + $0xf0] sm:$0xff]
      %v2256 = vld [vmem:[%s2224 + $0xf8] sm:$0xff]
      %v2257 = vld [vmem:[%s2224 + $0x100] sm:$0xff]
      %v2258 = vld [vmem:[%s2224 + $0x108] sm:$0xff]
      %v2259 = vld [vmem:[%s2224 + $0x110] sm:$0xff]
      %v2260 = vld [vmem:[%s2224 + $0x118] sm:$0xff]
      %v2267 = vrot.slane %v2218, 2
      %v2268 = vrot.slane %v1961, 2
      %v2269 = vsel %vm1657, %v2267, %v2268
      %v2270 = vrot.slane %v2219, 2
      %v2271 = vrot.slane %v1962, 2
      %v2272 = vsel %vm1657, %v2270, %v2271
      %v2273 = vrot.slane %v2220, 2
      %v2274 = vrot.slane %v1963, 2
      %v2275 = vsel %vm1657, %v2273, %v2274
      %v2276 = vrot.slane %v2221, 2
      %v2277 = vsel %vm1657, %v2268, %v2276
      %v2278 = vrot.slane %v2222, 2
      %v2279 = vsel %vm1657, %v2271, %v2278
      %v2280 = vrot.slane %v2223, 2
      %v2281 = vsel %vm1657, %v2274, %v2280
      %v2286 = vsel %vm849, %v2275, 0
      %v2288 = vsel %vm849, %v2281, 0
      %2290 = vmatpush.msra.mxu0 %v2240
      %2291 = vmatpush.msra.mxu0 %v2239
      %2292 = vmatpush.msra.mxu0 %v2238
      %2293 = vmatpush.msra.mxu0 %v2237
      %2294 = vmatpush.msra.mxu0 %v2236
      %2295 = vmatpush.msra.mxu0 %v2235
      %2296 = vmatpush.msra.mxu0 %v2234
      %2297 = vmatpush.msra.mxu0 %v2233
      %2298 = vmatpush.msra.mxu0 %v2232
      %2299 = vmatpush.msra.mxu0 %v2231
      %2300 = vmatpush.msra.mxu0 %v2230
      %2301 = vmatpush.msra.mxu0 %v2229
      %2302 = vmatpush.msra.mxu0 %v2228
      %2303 = vmatpush.msra.mxu0 %v2227
      %2304 = vmatpush.msra.mxu0 %v2226
      %2305 = vmatpush.msra.mxu0 %v2225
      %2306 = vmatmul.f32.gmra.mxu0 %v2269
      %v2307 = vpop.f32.mrf.mxu0
      %v2308 = vadd.f32 0.0, %v2307
      %2309 = vmatmul.f32.gmra.mxu0 %v2277
      %v2310 = vpop.f32.mrf.mxu0
      %v2311 = vadd.f32 0.0, %v2310
      %2312 = vdwg.mxu0
      %2313 = vmatpush.msra.mxu0 %v2256
      %2314 = vmatpush.msra.mxu0 %v2255
      %2315 = vmatpush.msra.mxu0 %v2254
      %2316 = vmatpush.msra.mxu0 %v2253
      %2317 = vmatpush.msra.mxu0 %v2252
      %2318 = vmatpush.msra.mxu0 %v2251
      %2319 = vmatpush.msra.mxu0 %v2250
      %2320 = vmatpush.msra.mxu0 %v2249
      %2321 = vmatpush.msra.mxu0 %v2248
      %2322 = vmatpush.msra.mxu0 %v2247
      %2323 = vmatpush.msra.mxu0 %v2246
      %2324 = vmatpush.msra.mxu0 %v2245
      %2325 = vmatpush.msra.mxu0 %v2244
      %2326 = vmatpush.msra.mxu0 %v2243
      %2327 = vmatpush.msra.mxu0 %v2242
      %2328 = vmatpush.msra.mxu0 %v2241
      %2329 = vmatmul.f32.gmra.mxu0 %v2272
      %v2330 = vpop.f32.mrf.mxu0
      %v2331 = vadd.f32 %v2308, %v2330
      %2332 = vmatmul.f32.gmra.mxu0 %v2279
      %v2333 = vpop.f32.mrf.mxu0
      %v2334 = vadd.f32 %v2311, %v2333
      %2335 = vdwg.mxu0
      %2336 = vmatpush.msra.mxu0 0.0
      %2337 = vmatpush.msra.mxu0 0.0
      %2338 = vmatpush.msra.mxu0 0.0
      %2339 = vmatpush.msra.mxu0 0.0
      %2340 = vmatpush.msra.mxu0 0.0
      %2341 = vmatpush.msra.mxu0 0.0
      %2342 = vmatpush.msra.mxu0 0.0
      %2343 = vmatpush.msra.mxu0 0.0
      %2344 = vmatpush.msra.mxu0 0.0
      %2345 = vmatpush.msra.mxu0 0.0
      %2346 = vmatpush.msra.mxu0 0.0
      %2347 = vmatpush.msra.mxu0 0.0
      %2348 = vmatpush.msra.mxu0 %v2260
      %2349 = vmatpush.msra.mxu0 %v2259
      %2350 = vmatpush.msra.mxu0 %v2258
      %2351 = vmatpush.msra.mxu0 %v2257
      %2352 = vmatmul.f32.gmra.mxu0 %v2286
      %v2353 = vpop.f32.mrf.mxu0
      %v2354 = vadd.f32 %v2331, %v2353
      %2355 = vmatmul.f32.gmra.mxu0 %v2288
      %v2356 = vpop.f32.mrf.mxu0
      %v2357 = vadd.f32 %v2334, %v2356
      %2358 = vdwg.mxu0
      %v2359 = vadd.f32 %v2213, %v2354
      %v2360 = vadd.f32 %v2216, %v2357
      %v2361 = vld [vmem:[%s6] sm:$0x1]
      %v2363 = vperm.slane %v2361, 0
      %v2365 = vadd.f32 %v2359, %v2363
      %v2366 = vadd.f32 %v2360, %v2363
      %v2367 = vmax.f32 %v2365, 0.0
      %v2368 = vmax.f32 %v2366, 0.0
      %2369 = vst [vmem:[%s318] sm:$0xff] %v2367
      %2370 = vst [vmem:[%s318 + $0x8] sm:$0xff] %v2368
      %p2371 = scmp.lt.s32.totalorder %s20, 1
      %s2372 = scalar_select %p2371, %s20, 1
      %s2373 = smul.addr %s2372, 6
      %s2374 = smul.addr %s2373, 8
      %s2375 = scalar_lea.vmem %s7, %s2374
      %p2376 = scmp.lt.s32.totalorder %s20, 1
      %s2377 = scalar_select %p2376, %s20, 1
      %s2378 = smul.addr %s2377, 2
      %s2379 = smul.addr %s2378, 8
      %s2380 = scalar_lea.vmem %s8, %s2379
      // Predicated region
      $region49: #{_lambda_.1} parent=47 // pred_check
        %p2381 = pneg %p190
      $region50: #{_lambda_.1} parent=47 // pred_check_branch
        %2383 = sbr.rel (%p2381) target = $region52
      $region51: #{_lambda_.1} parent=47 // pred_region
        _
      $region52: #{_lambda_.1} parent=47 // pred_fallthru
        _
      // Predicated region
      $region53: #{_lambda_.1} parent=47 // pred_check
        %p2384 = pneg %p216
      $region54: #{_lambda_.1} parent=47 // pred_check_branch
        %2386 = sbr.rel (%p2384) target = $region56
      $region55: #{_lambda_.1} parent=47 // pred_region
        _
      $region56: #{_lambda_.1} parent=47 // pred_fallthru
        _
    $region48: #{_lambda_.1} parent=5 // pred_fallthru
      _
    %p2387 = scmp.le.s32.totalorder 2, %s15
    // Predicated region
    $region57: #{_lambda_.1} parent=5 // pred_check
      %p2388 = pneg %p2387
    $region58: #{_lambda_.1} parent=5 // pred_check_branch
      %2390 = sbr.rel (%p2388) target = $region60
    $region59: #{_lambda_.1} parent=5 // pred_region
      %s2391 = ssub.s32 %s15, 2
      // Predicated region
      $region61: #{_lambda_.1} parent=59 // pred_check
        %p2392 = pneg %p196
      $region62: #{_lambda_.1} parent=59 // pred_check_branch
        %2394 = sbr.rel (%p2392) target = $region64
      $region63: #{_lambda_.1} parent=59 // pred_region
        %p2395 = scmp.lt.s32.totalorder %s21, 1
        %s2396 = scalar_select %p2395, %s21, 1
        %s2397 = smul.addr %s2396, 6
        %s2398 = smul.addr %s2397, 8
        %s2399 = scalar_lea.vmem %s7, %s2398
      $region64: #{_lambda_.1} parent=59 // pred_fallthru
        _
      // Predicated region
      $region65: #{_lambda_.1} parent=59 // pred_check
        %p2400 = pneg %p222
      $region66: #{_lambda_.1} parent=59 // pred_check_branch
        %2402 = sbr.rel (%p2400) target = $region68
      $region67: #{_lambda_.1} parent=59 // pred_region
        %p2403 = scmp.lt.s32.totalorder %s21, 1
        %s2404 = scalar_select %p2403, %s21, 1
        %s2405 = smul.addr %s2404, 2
        %s2406 = smul.addr %s2405, 8
        %s2407 = scalar_lea.vmem %s8, %s2406
      $region68: #{_lambda_.1} parent=59 // pred_fallthru
        _
    $region60: #{_lambda_.1} parent=5 // pred_fallthru
      _
  $region6: #{_lambda_.1} parent=0 // loop_footer
    %s19 = sadd.s32 1, %s15
  $region7: #{_lambda_.1} parent=0 // loop_footer_branch
    %14 = sbr.rel target = $region3
  $region8: #{_lambda_.1} parent=0 // loop_exit
    _

</llo_original>
